<compile_context>
chip_gen: v7x
topology: tpu7x:2x2x1
jax: 0.10.0
libtpu: 0.0.40
codegen_flags: <defaults>
</compile_context>

<pallas_src>
import functools

import jax
import jax.numpy as jnp
from jax.experimental import pallas as pl
from jax.experimental.pallas import tpu as pltpu


# ------------------------------- small helpers -------------------------------

def _round_up(x, m):
    return ((x + m - 1) // m) * m


def _pad_axis(x, axis, target):
    if x.shape[axis] == target:
        return x
    cfg = [(0, 0)] * x.ndim
    cfg[axis] = (0, target - x.shape[axis])
    return jnp.pad(x, cfg)


def _pick_tile(dim, pref):
    """Largest convenient tile that divides `dim` (dims are pre-padded to 8/128 multiples)."""
    if dim <= pref:
        return dim
    for t in (pref, pref // 2, 128, 8):
        if t > 0 and dim % t == 0:
            return t
    return dim


def _pick_time_chunk(T, budget=64):
    t_blk = min(T, budget)
    while T % t_blk:
        t_blk -= 1
    return t_blk


# ----------------------- tiled GEMM (+bias) pallas kernel ---------------------
# Used for (a) the hoisted per-layer input projection over all timesteps and
# (b) the final vocabulary projection.  Operands are cast to bf16 for the MXU,
# accumulation stays f32 (f32 gates / logits).

def _gemm_bias_kernel(x_ref, w_ref, b_ref, o_ref, acc_ref):
    @pl.when(pl.program_id(2) == 0)
    def _():
        acc_ref[...] = jnp.zeros_like(acc_ref)

    acc_ref[...] += jnp.dot(x_ref[...].astype(jnp.bfloat16), w_ref[...],
                            preferred_element_type=jnp.float32)

    @pl.when(pl.program_id(2) == pl.num_programs(2) - 1)
    def _():
        o_ref[...] = acc_ref[...] + b_ref[...]


def matmul_bias(x, w, b, tm=256, tn=256, tk=512):
    """x: (M, K) f32/bf16; w: (K, N) bf16; b: (1, N) f32 -> (M, N) f32. N, K multiples of 128."""
    M, K = x.shape
    _, N = w.shape
    M_pad = _round_up(M, 8)
    x = _pad_axis(x, 0, M_pad)
    bm = _pick_tile(M_pad, tm)
    bn = _pick_tile(N, tn)
    bk = _pick_tile(K, tk)
    grid = (M_pad // bm, N // bn, K // bk)

    out = pl.pallas_call(
        _gemm_bias_kernel,
        out_shape=jax.ShapeDtypeStruct((M_pad, N), jnp.float32),
        grid_spec=pltpu.PrefetchScalarGridSpec(
            num_scalar_prefetch=0,
            grid=grid,
            in_specs=[
                pl.BlockSpec((bm, bk), lambda i, j, k: (i, k)),
                pl.BlockSpec((bk, bn), lambda i, j, k: (k, j)),
                pl.BlockSpec((1, bn), lambda i, j, k: (0, j)),
            ],
            out_specs=pl.BlockSpec((bm, bn), lambda i, j, k: (i, j)),
            scratch_shapes=[pltpu.VMEM((bm, bn), jnp.float32)],
        ),
        compiler_params=pltpu.CompilerParams(
            dimension_semantics=("parallel", "parallel", "arbitrary"),
            vmem_limit_bytes=32 * 1024 * 1024,
        ),
    )(x, w, b)
    return out[:M]


# ------------------------- LSTM recurrence pallas kernel ----------------------
# One grid step = one chunk of T_blk timesteps.  Pre-computed gates (x@W_ih + b)
# arrive as a VMEM-resident slab; the in-kernel fori_loop only does
# h_prev @ W_hh + elementwise gate math, carrying (h, c) in VMEM scratch.

def _lstm_recurrent_kernel(len_ref, gates_ref, whh_ref, o_ref, h_sc, c_sc):
    chunk = pl.program_id(0)
    t_blk = gates_ref.shape[0]
    hpad = h_sc.shape[-1]

    @pl.when(chunk == 0)
    def _():
        h_sc[...] = jnp.zeros_like(h_sc)
        c_sc[...] = jnp.zeros_like(c_sc)

    lengths = len_ref[...]                      # (B_pad, 1) int32, loaded once per chunk

    def step(tt, carry):
        h, c = carry                            # (B_pad, H_pad) f32
        t = chunk * t_blk + tt                  # global timestep
        gates = gates_ref[tt] + jnp.dot(h.astype(jnp.bfloat16), whh_ref[...],
                                        preferred_element_type=jnp.float32)  # (B_pad, 4H_pad)
        # torch gate order [i, f, g, o]; slices are lane-aligned (H_pad multiple of 128)
        i_g = jax.nn.sigmoid(gates[:, 0 * hpad:1 * hpad])
        f_g = jax.nn.sigmoid(gates[:, 1 * hpad:2 * hpad])
        g_g = jnp.tanh(gates[:, 2 * hpad:3 * hpad])
        o_g = jax.nn.sigmoid(gates[:, 3 * hpad:4 * hpad])

        c_new = f_g * c + i_g * g_g
        h_new = o_g * jnp.tanh(c_new)

        # packed-sequence semantics: freeze state and emit zeros past the length
        valid = t < lengths                     # (B_pad, 1) bool
        h = jnp.where(valid, h_new, h)
        c = jnp.where(valid, c_new, c)
        o_ref[tt] = jnp.where(valid, h_new, 0.0)
        return h, c

    h_fin, c_fin = jax.lax.fori_loop(0, t_blk, step, (h_sc[...], c_sc[...]))
    h_sc[...] = h_fin
    c_sc[...] = c_fin


def lstm_recurrent(gates_tbg, w_hh, lengths_b1):
    """gates_tbg: (T, B_pad, 4H_pad) f32; w_hh: (H_pad, 4H_pad) bf16; lengths: (B_pad,1) i32."""
    T, B_pad, G = gates_tbg.shape
    H_pad = G // 4
    t_blk = _pick_time_chunk(T)

    return pl.pallas_call(
        _lstm_recurrent_kernel,
        out_shape=jax.ShapeDtypeStruct((T, B_pad, H_pad), jnp.float32),
        grid_spec=pltpu.PrefetchScalarGridSpec(
            num_scalar_prefetch=0,
            grid=(T // t_blk,),
            in_specs=[
                pl.BlockSpec((B_pad, 1), lambda i: (0, 0)),             # seq lengths
                pl.BlockSpec((t_blk, B_pad, G), lambda i: (i, 0, 0)),   # pre-gates chunk
                pl.BlockSpec((H_pad, G), lambda i: (0, 0)),             # W_hh (constant)
            ],
            out_specs=pl.BlockSpec((t_blk, B_pad, H_pad), lambda i: (i, 0, 0)),
            scratch_shapes=[
                pltpu.VMEM((B_pad, H_pad), jnp.float32),   # h state (carried across chunks)
                pltpu.VMEM((B_pad, H_pad), jnp.float32),   # c state
            ],
        ),
        compiler_params=pltpu.CompilerParams(
            dimension_semantics=("arbitrary",),
            vmem_limit_bytes=32 * 1024 * 1024,
        ),
    )(lengths_b1, gates_tbg, w_hh)


# ------------------------- parameter padding / preparation --------------------

def prepare_params(params):
    """Pad to TPU-friendly shapes (lane/sublane multiples) and pre-cast matmul weights to bf16.

    Gate columns are padded per-gate so gate k lives at [k*H_pad, k*H_pad + H); all padded
    weight/bias entries are zero, which keeps padded hidden units identically zero."""
    emb = params["embedding"]
    nwords, E = emb.shape
    E_pad = _round_up(E, 128)

    lstm_layers = []
    in_pad = E_pad
    for layer in params["lstm"]:
        w_ih, w_hh, b = layer["w_ih"], layer["w_hh"], layer["b"]
        in_size, G = w_ih.shape
        H = G // 4
        H_pad = _round_up(H, 128)

        def pad_gate_cols(w, rows_pad, H=H, H_pad=H_pad):
            w = w.reshape(w.shape[0], 4, H)
            w = _pad_axis(w, 2, H_pad)
            w = _pad_axis(w, 0, rows_pad)
            return w.reshape(rows_pad, 4 * H_pad)

        lstm_layers.append({
            "w_ih": pad_gate_cols(w_ih, in_pad).astype(jnp.bfloat16),
            "w_hh": pad_gate_cols(w_hh, H_pad).astype(jnp.bfloat16),
            "b": _pad_axis(b.reshape(4, H), 1, H_pad).reshape(1, 4 * H_pad).astype(jnp.float32),
        })
        in_pad = H_pad

    V_pad = _round_up(nwords, 128)
    proj_w_t = params["proj_w_t"]                      # (H, V)
    proj_w_p = _pad_axis(_pad_axis(proj_w_t, 0, in_pad), 1, V_pad).astype(jnp.bfloat16)
    proj_b_p = _pad_axis(params["proj_b"], 0, V_pad).reshape(1, V_pad).astype(jnp.float32)

    return {
        "embedding": _pad_axis(emb, 1, E_pad).astype(jnp.float32),
        "lstm": lstm_layers,
        "proj_w_t": proj_w_p,
        "proj_b": proj_b_p,
    }


# ------------------------------- full forward ---------------------------------

@functools.partial(jax.jit, static_argnames=("nwords",))
def lstm_class_forward(prepared, words, seq_lengths, *, nwords):
    """words: (B, T) int32; seq_lengths: (B,) int32 (sorted descending, max(seq_lengths)==T)."""
    B, T = words.shape
    B_pad = _round_up(B, 8)

    # Embedding lookup (gather) as JAX glue, produced directly in time-major layout.
    x = jnp.take(prepared["embedding"], words.T, axis=0)       # (T, B, E_pad) f32
    x = _pad_axis(x, 1, B_pad)                                 # (T, B_pad, E_pad)

    lengths = _pad_axis(seq_lengths.astype(jnp.int32), 0, B_pad).reshape(B_pad, 1)

    for layer in prepared["lstm"]:
        in_pad = x.shape[-1]
        H_pad = layer["w_hh"].shape[0]
        # (1) hoisted input projection: one big GEMM over all timesteps
        pre = matmul_bias(x.reshape(T * B_pad, in_pad), layer["w_ih"], layer["b"])
        pre = pre.reshape(T, B_pad, 4 * H_pad)                 # (T, B_pad, 4H_pad) f32
        # (2) serial recurrence over VMEM-resident time chunks
        x = lstm_recurrent(pre, layer["w_hh"], lengths)        # (T, B_pad, H_pad) f32
        # TODO(synk): dropout between LSTM layers skipped (inference / eval mode).

    H_pad = x.shape[-1]
    # single transpose back to batch-first, exactly like torch's lstm_out.view(B*T, -1)
    lstm_out = jnp.transpose(x[:, :B, :], (1, 0, 2)).reshape(B * T, H_pad)
    logits = matmul_bias(lstm_out, prepared["proj_w_t"], prepared["proj_b"])  # (B*T, V_pad)
    return logits[:, :nwords]


# ------------------------------- parameter init --------------------------------

def init_params(key, nwords, emb_size, hidden_size, nlayers, padding_idx=0):
    keys = jax.random.split(key, 3 + 4 * nlayers)
    k_emb, k_proj, k_projb = keys[0], keys[1], keys[2]
    lstm_keys = keys[3:3 + 4 * nlayers]

    # embedding: uniform(-0.25, 0.25); padding_idx row zeroed (torch padding_idx semantics)
    embedding = jax.random.uniform(k_emb, (nwords, emb_size),
                                   minval=-0.25, maxval=0.25, dtype=jnp.float32)
    embedding = embedding.at[padding_idx].set(0.0)

    # LSTM: torch default init uniform(-1/sqrt(H), 1/sqrt(H)); gate order [i, f, g, o]
    std = 1.0 / float(hidden_size) ** 0.5
    lstm = []
    for l in range(nlayers):
        in_size = emb_size if l == 0 else hidden_size
        k0, k1, k2, k3 = lstm_keys[4 * l:4 * l + 4]
        w_ih = jax.random.uniform(k0, (in_size, 4 * hidden_size),
                                  minval=-std, maxval=std, dtype=jnp.float32)
        w_hh = jax.random.uniform(k1, (hidden_size, 4 * hidden_size),
                                  minval=-std, maxval=std, dtype=jnp.float32)
        b_ih = jax.random.uniform(k2, (4 * hidden_size,),
                                  minval=-std, maxval=std, dtype=jnp.float32)
        b_hh = jax.random.uniform(k3, (4 * hidden_size,),
                                  minval=-std, maxval=std, dtype=jnp.float32)
        lstm.append({"w_ih": w_ih, "w_hh": w_hh, "b": b_ih + b_hh})

    # projection: xavier_uniform on (nwords, hidden); stored transposed (H, V)
    limit = (6.0 / (hidden_size + nwords)) ** 0.5
    proj_w = jax.random.uniform(k_proj, (nwords, hidden_size),
                                minval=-limit, maxval=limit, dtype=jnp.float32)
    proj_b = jax.random.uniform(k_projb, (nwords,),
                                minval=-std, maxval=std, dtype=jnp.float32)

    return {"embedding": embedding, "lstm": lstm,
            "proj_w_t": proj_w.T, "proj_b": proj_b}


# ------------------------------------ main --------------------------------------

if __name__ == "__main__":
    NWORDS = 128
    EMB = 32
    HIDDEN = 32
    NLAYERS = 2
    PADDING_IDX = 0
    B, T = 4, 8

    key = jax.random.PRNGKey(0)
    k_params, k_words = jax.random.split(key)

    params = init_params(k_params, NWORDS, EMB, HIDDEN, NLAYERS, PADDING_IDX)
    prepared = prepare_params(params)

    # lengths sorted descending (pack_padded_sequence enforce_sorted default);
    # max length must equal T so torch's .view(B*T, -1) is well defined.
    seq_lengths = jnp.array([8, 6, 4, 2], dtype=jnp.int32)
    assert int(seq_lengths.max()) == T

    words = jax.random.randint(k_words, (B, T), 1, NWORDS, dtype=jnp.int32)
    pos_mask = jnp.arange(T)[None, :] < seq_lengths[:, None]
    words = jnp.where(pos_mask, words, PADDING_IDX).astype(jnp.int32)

    logits = lstm_class_forward(prepared, words, seq_lengths, nwords=NWORDS)
    logits = jax.block_until_ready(logits)

    assert logits.shape == (B * T, NWORDS), logits.shape
    assert logits.dtype == jnp.float32
    assert bool(jnp.all(jnp.isfinite(logits)))
    print("KERNEL_OK")
</pallas_src>

<mosaic_0001>
module attributes {stable_mosaic.version = 11 : i64} {
  func.func @_lstm_recurrent_kernel(%arg0: i32, %arg1: memref<8x1xi32, #tpu.memory_space<vmem>>, %arg2: memref<8x8x512xf32, #tpu.memory_space<vmem>>, %arg3: memref<128x512xbf16, #tpu.memory_space<vmem>>, %arg4: memref<8x8x128xf32, #tpu.memory_space<vmem>>, %arg5: memref<8x128xf32, #tpu.memory_space<vmem>>, %arg6: memref<8x128xf32, #tpu.memory_space<vmem>>) attributes {dimension_semantics = [#tpu.dimension_semantics<arbitrary>], iteration_bounds = array<i64: 1>, scalar_prefetch = 0 : i64, scratch_operands = 2 : i64, tpu.core_type = #tpu.core_type<tc>, window_params = [{pipeline_mode = #tpu.pipeline_mode<synchronous>, transform_indices = @transform_0, window_bounds = array<i64: 8, 1>}, {transform_indices = @transform_1, window_bounds = array<i64: 8, 8, 512>}, {pipeline_mode = #tpu.pipeline_mode<synchronous>, transform_indices = @transform_2, window_bounds = array<i64: 128, 512>}, {transform_indices = @transform_3, window_bounds = array<i64: 8, 8, 128>}]} {
    %c0_i32 = arith.constant 0 : i32
    %0 = arith.cmpi eq, %arg0, %c0_i32 : i32
    %1 = arith.extui %0 : i1 to i32
    %c0_i32_0 = arith.constant 0 : i32
    %2 = arith.cmpi ne, %1, %c0_i32_0 : i32
    scf.if %2 {
      %cst = arith.constant 0.000000e+00 : f32
      %10 = vector.broadcast %cst : f32 to vector<8x128xf32>
      %c0_12 = arith.constant 0 : index
      %c0_13 = arith.constant 0 : index
      %11 = vector.load %arg5[%c0_12, %c0_13] : memref<8x128xf32, #tpu.memory_space<vmem>>, vector<8x128xf32>
      tpu.vector_store %arg5[%c0_12, %c0_13], %10 {strides = array<i32>} : memref<8x128xf32, #tpu.memory_space<vmem>>, vector<8x128xf32>,
      %cst_14 = arith.constant 0.000000e+00 : f32
      %12 = vector.broadcast %cst_14 : f32 to vector<8x128xf32>
      %c0_15 = arith.constant 0 : index
      %c0_16 = arith.constant 0 : index
      %13 = vector.load %arg6[%c0_15, %c0_16] : memref<8x128xf32, #tpu.memory_space<vmem>>, vector<8x128xf32>
      tpu.vector_store %arg6[%c0_15, %c0_16], %12 {strides = array<i32>} : memref<8x128xf32, #tpu.memory_space<vmem>>, vector<8x128xf32>,
    } else {
    }
    %c0 = arith.constant 0 : index
    %c0_1 = arith.constant 0 : index
    %3 = vector.load %arg1[%c0, %c0_1] : memref<8x1xi32, #tpu.memory_space<vmem>>, vector<8x1xi32>
    %c0_2 = arith.constant 0 : index
    %c0_3 = arith.constant 0 : index
    %4 = vector.load %arg5[%c0_2, %c0_3] : memref<8x128xf32, #tpu.memory_space<vmem>>, vector<8x128xf32>
    %c0_4 = arith.constant 0 : index
    %c0_5 = arith.constant 0 : index
    %5 = vector.load %arg6[%c0_4, %c0_5] : memref<8x128xf32, #tpu.memory_space<vmem>>, vector<8x128xf32>
    %c0_i32_6 = arith.constant 0 : i32
    %c8_i32 = arith.constant 8 : i32
    %6 = arith.addi %c0_i32_6, %c8_i32 : i32
    %c1_i32 = arith.constant 1 : i32
    %7:2 = scf.for %arg7 = %c0_i32_6 to %6 step %c1_i32 iter_args(%arg8 = %4, %arg9 = %5) -> (vector<8x128xf32>, vector<8x128xf32>)  : i32 {
      %c8_i32_12 = arith.constant 8 : i32
      %10 = arith.muli %arg0, %c8_i32_12 : i32
      %11 = arith.addi %10, %arg7 : i32
      %12 = arith.index_cast %arg7 : i32 to index
      %c0_13 = arith.constant 0 : index
      %c0_14 = arith.constant 0 : index
      %13 = vector.load %arg2[%12, %c0_13, %c0_14] : memref<8x8x512xf32, #tpu.memory_space<vmem>>, vector<1x8x512xf32>
      %14 = vector.shape_cast %13 : vector<1x8x512xf32> to vector<8x512xf32>
      %15 = arith.truncf %arg8 : vector<8x128xf32> to vector<8x128xbf16>
      %c0_15 = arith.constant 0 : index
      %c0_16 = arith.constant 0 : index
      %16 = vector.load %arg3[%c0_15, %c0_16] : memref<128x512xbf16, #tpu.memory_space<vmem>>, vector<128x512xbf16>
      %cst = arith.constant dense<0.000000e+00> : vector<8x512xf32>
      %17 = tpu.matmul %15, %16, %cst {dimension_numbers = #tpu.dot_dimension_numbers<[1], [0], [0], [1], [0, 0, 1, 1], [], []>} : vector<8x128xbf16>, vector<128x512xbf16>, vector<8x512xf32> -> vector<8x512xf32>
      %18 = arith.addf %14, %17 : vector<8x512xf32>
      %19 = vector.extract_strided_slice %18 {offsets = [0, 0], sizes = [8, 128], strides = [1, 1]} : vector<8x512xf32> to vector<8x128xf32>
      %20 = arith.negf %19 : vector<8x128xf32>
      %21 = math.exp %20 : vector<8x128xf32>
      %cst_17 = arith.constant 1.000000e+00 : f32
      %22 = vector.broadcast %cst_17 : f32 to vector<8x128xf32>
      %23 = arith.addf %22, %21 : vector<8x128xf32>
      %24 = arith.divf %22, %23 : vector<8x128xf32>
      %25 = vector.extract_strided_slice %18 {offsets = [0, 128], sizes = [8, 128], strides = [1, 1]} : vector<8x512xf32> to vector<8x128xf32>
      %26 = arith.negf %25 : vector<8x128xf32>
      %27 = math.exp %26 : vector<8x128xf32>
      %cst_18 = arith.constant 1.000000e+00 : f32
      %28 = vector.broadcast %cst_18 : f32 to vector<8x128xf32>
      %29 = arith.addf %28, %27 : vector<8x128xf32>
      %30 = arith.divf %28, %29 : vector<8x128xf32>
      %31 = vector.extract_strided_slice %18 {offsets = [0, 256], sizes = [8, 128], strides = [1, 1]} : vector<8x512xf32> to vector<8x128xf32>
      %32 = math.tanh %31 : vector<8x128xf32>
      %33 = vector.extract_strided_slice %18 {offsets = [0, 384], sizes = [8, 128], strides = [1, 1]} : vector<8x512xf32> to vector<8x128xf32>
      %34 = arith.negf %33 : vector<8x128xf32>
      %35 = math.exp %34 : vector<8x128xf32>
      %cst_19 = arith.constant 1.000000e+00 : f32
      %36 = vector.broadcast %cst_19 : f32 to vector<8x128xf32>
      %37 = arith.addf %36, %35 : vector<8x128xf32>
      %38 = arith.divf %36, %37 : vector<8x128xf32>
      %39 = arith.mulf %30, %arg9 : vector<8x128xf32>
      %40 = arith.mulf %24, %32 : vector<8x128xf32>
      %41 = arith.addf %39, %40 : vector<8x128xf32>
      %42 = math.tanh %41 : vector<8x128xf32>
      %43 = arith.mulf %38, %42 : vector<8x128xf32>
      %44 = vector.broadcast %11 : i32 to vector<8x1xi32>
      %45 = arith.cmpi slt, %44, %3 : vector<8x1xi32>
      %46 = vector.shape_cast %45 : vector<8x1xi1> to vector<8x1xi1>
      %47 = vector.broadcast %46 : vector<8x1xi1> to vector<8x128xi1>
      %48 = arith.select %47, %43, %arg8 : vector<8x128xi1>, vector<8x128xf32>
      %49 = vector.shape_cast %45 : vector<8x1xi1> to vector<8x1xi1>
      %50 = vector.broadcast %49 : vector<8x1xi1> to vector<8x128xi1>
      %51 = arith.select %50, %41, %arg9 : vector<8x128xi1>, vector<8x128xf32>
      %cst_20 = arith.constant 0.000000e+00 : f32
      %52 = vector.shape_cast %45 : vector<8x1xi1> to vector<8x1xi1>
      %53 = vector.broadcast %52 : vector<8x1xi1> to vector<8x128xi1>
      %54 = vector.broadcast %cst_20 : f32 to vector<8x128xf32>
      %55 = arith.select %53, %43, %54 : vector<8x128xi1>, vector<8x128xf32>
      %56 = arith.index_cast %arg7 : i32 to index
      %c0_21 = arith.constant 0 : index
      %c0_22 = arith.constant 0 : index
      %57 = vector.load %arg4[%56, %c0_21, %c0_22] : memref<8x8x128xf32, #tpu.memory_space<vmem>>, vector<1x8x128xf32>
      %58 = vector.shape_cast %57 : vector<1x8x128xf32> to vector<8x128xf32>
      %59 = vector.shape_cast %55 : vector<8x128xf32> to vector<1x8x128xf32>
      tpu.vector_store %arg4[%56, %c0_21, %c0_22], %59 {strides = array<i32>} : memref<8x8x128xf32, #tpu.memory_space<vmem>>, vector<1x8x128xf32>,
      scf.yield %48, %51 : vector<8x128xf32>, vector<8x128xf32>
    }
    %c8_i32_7 = arith.constant 8 : i32
    %c0_8 = arith.constant 0 : index
    %c0_9 = arith.constant 0 : index
    %8 = vector.load %arg5[%c0_8, %c0_9] : memref<8x128xf32, #tpu.memory_space<vmem>>, vector<8x128xf32>
    tpu.vector_store %arg5[%c0_8, %c0_9], %7#0 {strides = array<i32>} : memref<8x128xf32, #tpu.memory_space<vmem>>, vector<8x128xf32>,
    %c0_10 = arith.constant 0 : index
    %c0_11 = arith.constant 0 : index
    %9 = vector.load %arg6[%c0_10, %c0_11] : memref<8x128xf32, #tpu.memory_space<vmem>>, vector<8x128xf32>
    tpu.vector_store %arg6[%c0_10, %c0_11], %7#1 {strides = array<i32>} : memref<8x128xf32, #tpu.memory_space<vmem>>, vector<8x128xf32>,
    return
  }
  func.func @transform_0(%arg0: i32) -> (i32, i32) {
    %c0_i32 = arith.constant 0 : i32
    %c0_i32_0 = arith.constant 0 : i32
    %c0_i32_1 = arith.constant 0 : i32
    return %c0_i32, %c0_i32_0 : i32, i32
  }
  func.func @transform_1(%arg0: i32) -> (i32, i32, i32) {
    %c0_i32 = arith.constant 0 : i32
    %c0_i32_0 = arith.constant 0 : i32
    %c0_i32_1 = arith.constant 0 : i32
    return %arg0, %c0_i32, %c0_i32_0 : i32, i32, i32
  }
  func.func @transform_2(%arg0: i32) -> (i32, i32) {
    %c0_i32 = arith.constant 0 : i32
    %c0_i32_0 = arith.constant 0 : i32
    %c0_i32_1 = arith.constant 0 : i32
    return %c0_i32, %c0_i32_0 : i32, i32
  }
  func.func @transform_3(%arg0: i32) -> (i32, i32, i32) {
    %c0_i32 = arith.constant 0 : i32
    %c0_i32_0 = arith.constant 0 : i32
    %c0_i32_1 = arith.constant 0 : i32
    return %arg0, %c0_i32, %c0_i32_0 : i32, i32, i32
  }
}

module attributes {stable_mosaic.version = 11 : i64} {
  func.func @_gemm_bias_kernel(%arg0: i32, %arg1: i32, %arg2: i32, %arg3: memref<64x128xf32, #tpu.memory_space<vmem>>, %arg4: memref<128x256xbf16, #tpu.memory_space<vmem>>, %arg5: memref<1x256xf32, #tpu.memory_space<vmem>>, %arg6: memref<64x256xf32, #tpu.memory_space<vmem>>, %arg7: memref<64x256xf32, #tpu.memory_space<vmem>>) attributes {dimension_semantics = [#tpu.dimension_semantics<parallel>, #tpu.dimension_semantics<parallel>, #tpu.dimension_semantics<arbitrary>], iteration_bounds = array<i64: 1, 2, 1>, scalar_prefetch = 0 : i64, scratch_operands = 1 : i64, tpu.core_type = #tpu.core_type<tc>, window_params = [{transform_indices = @transform_0, window_bounds = array<i64: 64, 128>}, {transform_indices = @transform_1, window_bounds = array<i64: 128, 256>}, {transform_indices = @transform_2, window_bounds = array<i64: 1, 256>}, {transform_indices = @transform_3, window_bounds = array<i64: 64, 256>}]} {
    %c0_i32 = arith.constant 0 : i32
    %0 = arith.cmpi eq, %arg2, %c0_i32 : i32
    %1 = arith.extui %0 : i1 to i32
    %c0_i32_0 = arith.constant 0 : i32
    %2 = arith.cmpi ne, %1, %c0_i32_0 : i32
    scf.if %2 {
      %cst_10 = arith.constant 0.000000e+00 : f32
      %13 = vector.broadcast %cst_10 : f32 to vector<64x256xf32>
      %c0_11 = arith.constant 0 : index
      %c0_12 = arith.constant 0 : index
      %14 = vector.load %arg7[%c0_11, %c0_12] : memref<64x256xf32, #tpu.memory_space<vmem>>, vector<64x256xf32>
      tpu.vector_store %arg7[%c0_11, %c0_12], %13 {strides = array<i32>} : memref<64x256xf32, #tpu.memory_space<vmem>>, vector<64x256xf32>,
    } else {
    }
    %c0 = arith.constant 0 : index
    %c0_1 = arith.constant 0 : index
    %3 = vector.load %arg7[%c0, %c0_1] : memref<64x256xf32, #tpu.memory_space<vmem>>, vector<64x256xf32>
    %c0_2 = arith.constant 0 : index
    %c0_3 = arith.constant 0 : index
    %4 = vector.load %arg3[%c0_2, %c0_3] : memref<64x128xf32, #tpu.memory_space<vmem>>, vector<64x128xf32>
    %5 = arith.truncf %4 : vector<64x128xf32> to vector<64x128xbf16>
    %c0_4 = arith.constant 0 : index
    %c0_5 = arith.constant 0 : index
    %6 = vector.load %arg4[%c0_4, %c0_5] : memref<128x256xbf16, #tpu.memory_space<vmem>>, vector<128x256xbf16>
    %cst = arith.constant dense<0.000000e+00> : vector<64x256xf32>
    %7 = tpu.matmul %5, %6, %cst {dimension_numbers = #tpu.dot_dimension_numbers<[1], [0], [0], [1], [0, 0, 1, 1], [], []>} : vector<64x128xbf16>, vector<128x256xbf16>, vector<64x256xf32> -> vector<64x256xf32>
    %8 = arith.addf %3, %7 : vector<64x256xf32>
    %c0_6 = arith.constant 0 : index
    %c0_7 = arith.constant 0 : index
    %9 = vector.load %arg7[%c0_6, %c0_7] : memref<64x256xf32, #tpu.memory_space<vmem>>, vector<64x256xf32>
    tpu.vector_store %arg7[%c0_6, %c0_7], %8 {strides = array<i32>} : memref<64x256xf32, #tpu.memory_space<vmem>>, vector<64x256xf32>,
    %c0_i32_8 = arith.constant 0 : i32
    %10 = arith.cmpi eq, %arg2, %c0_i32_8 : i32
    %11 = arith.extui %10 : i1 to i32
    %c0_i32_9 = arith.constant 0 : i32
    %12 = arith.cmpi ne, %11, %c0_i32_9 : i32
    scf.if %12 {
      %c0_10 = arith.constant 0 : index
      %c0_11 = arith.constant 0 : index
      %13 = vector.load %arg7[%c0_10, %c0_11] : memref<64x256xf32, #tpu.memory_space<vmem>>, vector<64x256xf32>
      %c0_12 = arith.constant 0 : index
      %c0_13 = arith.constant 0 : index
      %14 = vector.load %arg5[%c0_12, %c0_13] : memref<1x256xf32, #tpu.memory_space<vmem>>, vector<1x256xf32>
      %15 = vector.broadcast %14 : vector<1x256xf32> to vector<64x256xf32>
      %16 = arith.addf %13, %15 : vector<64x256xf32>
      %c0_14 = arith.constant 0 : index
      %c0_15 = arith.constant 0 : index
      %17 = vector.load %arg6[%c0_14, %c0_15] : memref<64x256xf32, #tpu.memory_space<vmem>>, vector<64x256xf32>
      tpu.vector_store %arg6[%c0_14, %c0_15], %16 {strides = array<i32>} : memref<64x256xf32, #tpu.memory_space<vmem>>, vector<64x256xf32>,
    } else {
    }
    return
  }
  func.func @transform_0(%arg0: i32, %arg1: i32, %arg2: i32) -> (i32, i32) {
    %c0_i32 = arith.constant 0 : i32
    return %arg0, %arg2 : i32, i32
  }
  func.func @transform_1(%arg0: i32, %arg1: i32, %arg2: i32) -> (i32, i32) {
    %c0_i32 = arith.constant 0 : i32
    return %arg2, %arg1 : i32, i32
  }
  func.func @transform_2(%arg0: i32, %arg1: i32, %arg2: i32) -> (i32, i32) {
    %c0_i32 = arith.constant 0 : i32
    %c0_i32_0 = arith.constant 0 : i32
    return %c0_i32, %arg1 : i32, i32
  }
  func.func @transform_3(%arg0: i32, %arg1: i32, %arg2: i32) -> (i32, i32) {
    %c0_i32 = arith.constant 0 : i32
    return %arg0, %arg1 : i32, i32
  }
}

module attributes {stable_mosaic.version = 11 : i64} {
  func.func @_gemm_bias_kernel(%arg0: i32, %arg1: i32, %arg2: i32, %arg3: memref<32x128xf32, #tpu.memory_space<vmem>>, %arg4: memref<128x128xbf16, #tpu.memory_space<vmem>>, %arg5: memref<1x128xf32, #tpu.memory_space<vmem>>, %arg6: memref<32x128xf32, #tpu.memory_space<vmem>>, %arg7: memref<32x128xf32, #tpu.memory_space<vmem>>) attributes {dimension_semantics = [#tpu.dimension_semantics<parallel>, #tpu.dimension_semantics<parallel>, #tpu.dimension_semantics<arbitrary>], iteration_bounds = array<i64: 1, 1, 1>, scalar_prefetch = 0 : i64, scratch_operands = 1 : i64, tpu.core_type = #tpu.core_type<tc>, window_params = [{transform_indices = @transform_0, window_bounds = array<i64: 32, 128>}, {transform_indices = @transform_1, window_bounds = array<i64: 128, 128>}, {transform_indices = @transform_2, window_bounds = array<i64: 1, 128>}, {transform_indices = @transform_3, window_bounds = array<i64: 32, 128>}]} {
    %c0_i32 = arith.constant 0 : i32
    %0 = arith.cmpi eq, %arg2, %c0_i32 : i32
    %1 = arith.extui %0 : i1 to i32
    %c0_i32_0 = arith.constant 0 : i32
    %2 = arith.cmpi ne, %1, %c0_i32_0 : i32
    scf.if %2 {
      %cst_10 = arith.constant 0.000000e+00 : f32
      %13 = vector.broadcast %cst_10 : f32 to vector<32x128xf32>
      %c0_11 = arith.constant 0 : index
      %c0_12 = arith.constant 0 : index
      %14 = vector.load %arg7[%c0_11, %c0_12] : memref<32x128xf32, #tpu.memory_space<vmem>>, vector<32x128xf32>
      tpu.vector_store %arg7[%c0_11, %c0_12], %13 {strides = array<i32>} : memref<32x128xf32, #tpu.memory_space<vmem>>, vector<32x128xf32>,
    } else {
    }
    %c0 = arith.constant 0 : index
    %c0_1 = arith.constant 0 : index
    %3 = vector.load %arg7[%c0, %c0_1] : memref<32x128xf32, #tpu.memory_space<vmem>>, vector<32x128xf32>
    %c0_2 = arith.constant 0 : index
    %c0_3 = arith.constant 0 : index
    %4 = vector.load %arg3[%c0_2, %c0_3] : memref<32x128xf32, #tpu.memory_space<vmem>>, vector<32x128xf32>
    %5 = arith.truncf %4 : vector<32x128xf32> to vector<32x128xbf16>
    %c0_4 = arith.constant 0 : index
    %c0_5 = arith.constant 0 : index
    %6 = vector.load %arg4[%c0_4, %c0_5] : memref<128x128xbf16, #tpu.memory_space<vmem>>, vector<128x128xbf16>
    %cst = arith.constant dense<0.000000e+00> : vector<32x128xf32>
    %7 = tpu.matmul %5, %6, %cst {dimension_numbers = #tpu.dot_dimension_numbers<[1], [0], [0], [1], [0, 0, 1, 1], [], []>} : vector<32x128xbf16>, vector<128x128xbf16>, vector<32x128xf32> -> vector<32x128xf32>
    %8 = arith.addf %3, %7 : vector<32x128xf32>
    %c0_6 = arith.constant 0 : index
    %c0_7 = arith.constant 0 : index
    %9 = vector.load %arg7[%c0_6, %c0_7] : memref<32x128xf32, #tpu.memory_space<vmem>>, vector<32x128xf32>
    tpu.vector_store %arg7[%c0_6, %c0_7], %8 {strides = array<i32>} : memref<32x128xf32, #tpu.memory_space<vmem>>, vector<32x128xf32>,
    %c0_i32_8 = arith.constant 0 : i32
    %10 = arith.cmpi eq, %arg2, %c0_i32_8 : i32
    %11 = arith.extui %10 : i1 to i32
    %c0_i32_9 = arith.constant 0 : i32
    %12 = arith.cmpi ne, %11, %c0_i32_9 : i32
    scf.if %12 {
      %c0_10 = arith.constant 0 : index
      %c0_11 = arith.constant 0 : index
      %13 = vector.load %arg7[%c0_10, %c0_11] : memref<32x128xf32, #tpu.memory_space<vmem>>, vector<32x128xf32>
      %c0_12 = arith.constant 0 : index
      %c0_13 = arith.constant 0 : index
      %14 = vector.load %arg5[%c0_12, %c0_13] : memref<1x128xf32, #tpu.memory_space<vmem>>, vector<1x128xf32>
      %15 = vector.broadcast %14 : vector<1x128xf32> to vector<32x128xf32>
      %16 = arith.addf %13, %15 : vector<32x128xf32>
      %c0_14 = arith.constant 0 : index
      %c0_15 = arith.constant 0 : index
      %17 = vector.load %arg6[%c0_14, %c0_15] : memref<32x128xf32, #tpu.memory_space<vmem>>, vector<32x128xf32>
      tpu.vector_store %arg6[%c0_14, %c0_15], %16 {strides = array<i32>} : memref<32x128xf32, #tpu.memory_space<vmem>>, vector<32x128xf32>,
    } else {
    }
    return
  }
  func.func @transform_0(%arg0: i32, %arg1: i32, %arg2: i32) -> (i32, i32) {
    %c0_i32 = arith.constant 0 : i32
    return %arg0, %arg2 : i32, i32
  }
  func.func @transform_1(%arg0: i32, %arg1: i32, %arg2: i32) -> (i32, i32) {
    %c0_i32 = arith.constant 0 : i32
    return %arg2, %arg1 : i32, i32
  }
  func.func @transform_2(%arg0: i32, %arg1: i32, %arg2: i32) -> (i32, i32) {
    %c0_i32 = arith.constant 0 : i32
    %c0_i32_0 = arith.constant 0 : i32
    return %c0_i32, %arg1 : i32, i32
  }
  func.func @transform_3(%arg0: i32, %arg1: i32, %arg2: i32) -> (i32, i32) {
    %c0_i32 = arith.constant 0 : i32
    return %arg0, %arg1 : i32, i32
  }
}

</mosaic_0001>

<llo_original>
// kernel: lstm_class_forward.6
$region0: #{lstm_class_forward.6}
  #allocation0 [shape = 'u32[]', space=smem, size = 0x4, offset = 0x4, fixed_abs, tag = 'smem constant byte address 0x4 - core index']
  #allocation1 [shape = 'u32[144,128]{1,0:T(1,128)}', space=vmem, size = 0x12000, scoped, tag = 'internal scratch']
  #allocation2 [shape = 'f32[8,128]{1,0:T(8,128)}', space=vmem, size = 0x1000, scoped, tag = 'scratch operand']
  #allocation3 [shape = 'f32[8,128]{1,0:T(8,128)}', space=vmem, size = 0x1000, scoped, tag = 'scratch operand']
  %s0 = inlined_call_operand.vmem [shape: s32[8,1], index: 0, kind: input, shape index: {}]
  %s1 = inlined_call_operand.vmem [shape: f32[8,8,512], index: 1, kind: input, shape index: {}]
  %s2 = inlined_call_operand.vmem [shape: bf16[128,512], index: 2, kind: input, shape index: {}]
  %s3 = inlined_call_operand.vmem [shape: f32[8,8,128], index: 3, kind: output, shape index: {}]
  %s4 = sld [smem:[#allocation0]]
  $region33: #{lstm_class_forward.6} parent=0
    _
  %s6 = ssub.s32 1, %s4
  %s7 = scalar_select 0, %s6, %s4
  // Predicated region
  $region2: #{lstm_class_forward.6} parent=0 // pred_check
    _
  $region3: #{lstm_class_forward.6} parent=0 // pred_check_branch
    %9 = sbr.rel (0) target = $region5
  $region4: #{lstm_class_forward.6} parent=0 // pred_region
    _
  $region5: #{lstm_class_forward.6} parent=0 // pred_fallthru
    _
  // Predicated region
  $region6: #{lstm_class_forward.6} parent=0 // pred_check
    _
  $region7: #{lstm_class_forward.6} parent=0 // pred_check_branch
    %11 = sbr.rel (0) target = $region9
  $region8: #{lstm_class_forward.6} parent=0 // pred_region
    _
  $region9: #{lstm_class_forward.6} parent=0 // pred_fallthru
    _
  // Predicated region
  $region10: #{lstm_class_forward.6} parent=0 // pred_check
    _
  $region11: #{lstm_class_forward.6} parent=0 // pred_check_branch
    %13 = sbr.rel (0) target = $region13
  $region12: #{lstm_class_forward.6} parent=0 // pred_region
    _
  $region13: #{lstm_class_forward.6} parent=0 // pred_fallthru
    _
  %p15 = scmp.eq.s32.totalorder 0, 0
  // Predicated region
  $region14: #{lstm_class_forward.6} parent=0 // pred_check
    %p16 = pneg %p15
  $region15: #{lstm_class_forward.6} parent=0 // pred_check_branch
    %18 = sbr.rel (%p16) target = $region17
  $region16: #{lstm_class_forward.6} parent=0 // pred_region
    %19 = vst [vmem:[#allocation2] sm:$0xff] 0.0
    %20 = vst [vmem:[#allocation3] sm:$0xff] 0.0
  $region17: #{lstm_class_forward.6} parent=0 // pred_fallthru
    _
  %v21 = vld [vmem:[%s0] sm:$0xff]
  %v22 = vld [vmem:[#allocation2] sm:$0xff]
  %v23 = vld [vmem:[#allocation3] sm:$0xff]
  loop: start=0, step=1, limit=8
  $region18: #{lstm_class_forward.6} parent=0 // loop_pre_header
    _
  $region19: #{lstm_class_forward.6} parent=0 // loop_header
    %s25 = sphi 0, %s29
    %p26 = scmp.ge.s32.totalorder %s25, 8
    %v30 = vphi %v22, %v351
    %v31 = vphi %v23, %v352
  $region20: #{lstm_class_forward.6} parent=0 // loop_header_branch
    %28 = sbr.rel (%p26) target = $region24
  $region21: #{lstm_class_forward.6} parent=0 // loop_body
    %s32 = smul.u32 0, 8
    %s33 = sadd.s32 %s32, %s25
    %s34 = smul.u32 %s25, 4
    %s35 = smul.addr %s34, 8
    %s36 = scalar_lea.vmem %s1, %s35
    %v37 = vld [vmem:[%s36] sm:$0xff]
    %v38 = vld [vmem:[%s36 + $0x8] sm:$0xff]
    %v39 = vld [vmem:[%s36 + $0x10] sm:$0xff]
    %v40 = vld [vmem:[%s36 + $0x18] sm:$0xff]
    %v41 = vpack.c.bf16 %v30, %v30
    %v42 = vld [vmem:[%s2] sm:$0xff]
    %v43 = vld [vmem:[%s2 + $0x8] sm:$0xff]
    %v44 = vld [vmem:[%s2 + $0x10] sm:$0xff]
    %v45 = vld [vmem:[%s2 + $0x18] sm:$0xff]
    %v46 = vld [vmem:[%s2 + $0x20] sm:$0xff]
    %v47 = vld [vmem:[%s2 + $0x28] sm:$0xff]
    %v48 = vld [vmem:[%s2 + $0x30] sm:$0xff]
    %v49 = vld [vmem:[%s2 + $0x38] sm:$0xff]
    %v50 = vld [vmem:[%s2 + $0x40] sm:$0xff]
    %v51 = vld [vmem:[%s2 + $0x48] sm:$0xff]
    %v52 = vld [vmem:[%s2 + $0x50] sm:$0xff]
    %v53 = vld [vmem:[%s2 + $0x58] sm:$0xff]
    %v54 = vld [vmem:[%s2 + $0x60] sm:$0xff]
    %v55 = vld [vmem:[%s2 + $0x68] sm:$0xff]
    %v56 = vld [vmem:[%s2 + $0x70] sm:$0xff]
    %v57 = vld [vmem:[%s2 + $0x78] sm:$0xff]
    %v58 = vld [vmem:[%s2 + $0x80] sm:$0xff]
    %v59 = vld [vmem:[%s2 + $0x88] sm:$0xff]
    %v60 = vld [vmem:[%s2 + $0x90] sm:$0xff]
    %v61 = vld [vmem:[%s2 + $0x98] sm:$0xff]
    %v62 = vld [vmem:[%s2 + $0xa0] sm:$0xff]
    %v63 = vld [vmem:[%s2 + $0xa8] sm:$0xff]
    %v64 = vld [vmem:[%s2 + $0xb0] sm:$0xff]
    %v65 = vld [vmem:[%s2 + $0xb8] sm:$0xff]
    %v66 = vld [vmem:[%s2 + $0xc0] sm:$0xff]
    %v67 = vld [vmem:[%s2 + $0xc8] sm:$0xff]
    %v68 = vld [vmem:[%s2 + $0xd0] sm:$0xff]
    %v69 = vld [vmem:[%s2 + $0xd8] sm:$0xff]
    %v70 = vld [vmem:[%s2 + $0xe0] sm:$0xff]
    %v71 = vld [vmem:[%s2 + $0xe8] sm:$0xff]
    %v72 = vld [vmem:[%s2 + $0xf0] sm:$0xff]
    %v73 = vld [vmem:[%s2 + $0xf8] sm:$0xff]
    %v106 = vunpack.c.l.b16 %v42
    %v107 = vunpack.c.h.b16 %v42
    %v108 = vunpack.c.l.b16 %v43
    %v109 = vunpack.c.h.b16 %v43
    %v110 = vunpack.c.l.b16 %v44
    %v111 = vunpack.c.h.b16 %v44
    %v112 = vunpack.c.l.b16 %v45
    %v113 = vunpack.c.h.b16 %v45
    %v114 = vunpack.c.l.b16 %v46
    %v115 = vunpack.c.h.b16 %v46
    %v116 = vunpack.c.l.b16 %v47
    %v117 = vunpack.c.h.b16 %v47
    %v118 = vunpack.c.l.b16 %v48
    %v119 = vunpack.c.h.b16 %v48
    %v120 = vunpack.c.l.b16 %v49
    %v121 = vunpack.c.h.b16 %v49
    %v122 = vunpack.c.l.b16 %v50
    %v123 = vunpack.c.h.b16 %v50
    %v124 = vunpack.c.l.b16 %v51
    %v125 = vunpack.c.h.b16 %v51
    %v126 = vunpack.c.l.b16 %v52
    %v127 = vunpack.c.h.b16 %v52
    %v128 = vunpack.c.l.b16 %v53
    %v129 = vunpack.c.h.b16 %v53
    %v130 = vunpack.c.l.b16 %v54
    %v131 = vunpack.c.h.b16 %v54
    %v132 = vunpack.c.l.b16 %v55
    %v133 = vunpack.c.h.b16 %v55
    %v134 = vunpack.c.l.b16 %v56
    %v135 = vunpack.c.h.b16 %v56
    %v136 = vunpack.c.l.b16 %v57
    %v137 = vunpack.c.h.b16 %v57
    %v138 = vunpack.c.l.b16 %v58
    %v139 = vunpack.c.h.b16 %v58
    %v140 = vunpack.c.l.b16 %v59
    %v141 = vunpack.c.h.b16 %v59
    %v142 = vunpack.c.l.b16 %v60
    %v143 = vunpack.c.h.b16 %v60
    %v144 = vunpack.c.l.b16 %v61
    %v145 = vunpack.c.h.b16 %v61
    %v146 = vunpack.c.l.b16 %v62
    %v147 = vunpack.c.h.b16 %v62
    %v148 = vunpack.c.l.b16 %v63
    %v149 = vunpack.c.h.b16 %v63
    %v150 = vunpack.c.l.b16 %v64
    %v151 = vunpack.c.h.b16 %v64
    %v152 = vunpack.c.l.b16 %v65
    %v153 = vunpack.c.h.b16 %v65
    %v154 = vunpack.c.l.b16 %v66
    %v155 = vunpack.c.h.b16 %v66
    %v156 = vunpack.c.l.b16 %v67
    %v157 = vunpack.c.h.b16 %v67
    %v158 = vunpack.c.l.b16 %v68
    %v159 = vunpack.c.h.b16 %v68
    %v160 = vunpack.c.l.b16 %v69
    %v161 = vunpack.c.h.b16 %v69
    %v162 = vunpack.c.l.b16 %v70
    %v163 = vunpack.c.h.b16 %v70
    %v164 = vunpack.c.l.b16 %v71
    %v165 = vunpack.c.h.b16 %v71
    %v166 = vunpack.c.l.b16 %v72
    %v167 = vunpack.c.h.b16 %v72
    %v168 = vunpack.c.l.b16 %v73
    %v169 = vunpack.c.h.b16 %v73
    %v170 = vpack.c.b16 %v110, %v106
    %v171 = vpack.c.b16 %v111, %v107
    %v172 = vpack.c.b16 %v112, %v108
    %v173 = vpack.c.b16 %v113, %v109
    %v174 = vpack.c.b16 %v118, %v114
    %v175 = vpack.c.b16 %v119, %v115
    %v176 = vpack.c.b16 %v120, %v116
    %v177 = vpack.c.b16 %v121, %v117
    %v178 = vpack.c.b16 %v126, %v122
    %v179 = vpack.c.b16 %v127, %v123
    %v180 = vpack.c.b16 %v128, %v124
    %v181 = vpack.c.b16 %v129, %v125
    %v182 = vpack.c.b16 %v134, %v130
    %v183 = vpack.c.b16 %v135, %v131
    %v184 = vpack.c.b16 %v136, %v132
    %v185 = vpack.c.b16 %v137, %v133
    %v186 = vpack.c.b16 %v142, %v138
    %v187 = vpack.c.b16 %v143, %v139
    %v188 = vpack.c.b16 %v144, %v140
    %v189 = vpack.c.b16 %v145, %v141
    %v190 = vpack.c.b16 %v150, %v146
    %v191 = vpack.c.b16 %v151, %v147
    %v192 = vpack.c.b16 %v152, %v148
    %v193 = vpack.c.b16 %v153, %v149
    %v194 = vpack.c.b16 %v158, %v154
    %v195 = vpack.c.b16 %v159, %v155
    %v196 = vpack.c.b16 %v160, %v156
    %v197 = vpack.c.b16 %v161, %v157
    %v198 = vpack.c.b16 %v166, %v162
    %v199 = vpack.c.b16 %v167, %v163
    %v200 = vpack.c.b16 %v168, %v164
    %v201 = vpack.c.b16 %v169, %v165
    %234 = vmatprep.subr.bf16.mxu0 %v171
    %235 = vmatpush1.bf16.msra.mxu0 %v170
    %236 = vmatprep.subr.bf16.mxu0 %v175
    %237 = vmatpush1.bf16.msra.mxu0 %v174
    %238 = vmatprep.subr.bf16.mxu0 %v179
    %239 = vmatpush1.bf16.msra.mxu0 %v178
    %240 = vmatprep.subr.bf16.mxu0 %v183
    %241 = vmatpush1.bf16.msra.mxu0 %v182
    %242 = vmatprep.subr.bf16.mxu0 %v187
    %243 = vmatpush1.bf16.msra.mxu0 %v186
    %244 = vmatprep.subr.bf16.mxu0 %v191
    %245 = vmatpush1.bf16.msra.mxu0 %v190
    %246 = vmatprep.subr.bf16.mxu0 %v195
    %247 = vmatpush1.bf16.msra.mxu0 %v194
    %248 = vmatprep.subr.bf16.mxu0 %v199
    %249 = vmatpush1.bf16.msra.mxu0 %v198
    %250 = vmatprep.subr.bf16.mxu0 0
    %251 = vmatpush1.bf16.msra.mxu0 0
    %252 = vmatprep.subr.bf16.mxu0 0
    %253 = vmatpush1.bf16.msra.mxu0 0
    %254 = vmatprep.subr.bf16.mxu0 0
    %255 = vmatpush1.bf16.msra.mxu0 0
    %256 = vmatprep.subr.bf16.mxu0 0
    %257 = vmatpush1.bf16.msra.mxu0 0
    %258 = vmatprep.subr.bf16.mxu0 0
    %259 = vmatpush1.bf16.msra.mxu0 0
    %260 = vmatprep.subr.bf16.mxu0 0
    %261 = vmatpush1.bf16.msra.mxu0 0
    %262 = vmatprep.subr.bf16.mxu0 0
    %263 = vmatpush1.bf16.msra.mxu0 0
    %264 = vmatprep.subr.bf16.mxu0 0
    %265 = vmatpush1.bf16.msra.mxu0 0
    %266 = vmatprep.mubr.bf16.mxu0 0
    %267 = vmatmul.mubr.bf16.gmra.mrb[0].mxu0 %v41
    %v268 = vpop.f32.mrb[0].mxu0
    %v269 = vadd.f32 0.0, %v268
    %v270 = vpop.f32.mrb[0].mxu0
    %v271 = vadd.f32 0.0, %v270
    %v272 = vpop.f32.mrb[0].mxu0
    %v273 = vpop.f32.mrb[0].mxu0
    %274 = vdwg.mxu0
    %275 = vmatprep.subr.bf16.mxu0 %v173
    %276 = vmatpush1.bf16.msra.mxu0 %v172
    %277 = vmatprep.subr.bf16.mxu0 %v177
    %278 = vmatpush1.bf16.msra.mxu0 %v176
    %279 = vmatprep.subr.bf16.mxu0 %v181
    %280 = vmatpush1.bf16.msra.mxu0 %v180
    %281 = vmatprep.subr.bf16.mxu0 %v185
    %282 = vmatpush1.bf16.msra.mxu0 %v184
    %283 = vmatprep.subr.bf16.mxu0 %v189
    %284 = vmatpush1.bf16.msra.mxu0 %v188
    %285 = vmatprep.subr.bf16.mxu0 %v193
    %286 = vmatpush1.bf16.msra.mxu0 %v192
    %287 = vmatprep.subr.bf16.mxu0 %v197
    %288 = vmatpush1.bf16.msra.mxu0 %v196
    %289 = vmatprep.subr.bf16.mxu0 %v201
    %290 = vmatpush1.bf16.msra.mxu0 %v200
    %291 = vmatprep.subr.bf16.mxu0 0
    %292 = vmatpush1.bf16.msra.mxu0 0
    %293 = vmatprep.subr.bf16.mxu0 0
    %294 = vmatpush1.bf16.msra.mxu0 0
    %295 = vmatprep.subr.bf16.mxu0 0
    %296 = vmatpush1.bf16.msra.mxu0 0
    %297 = vmatprep.subr.bf16.mxu0 0
    %298 = vmatpush1.bf16.msra.mxu0 0
    %299 = vmatprep.subr.bf16.mxu0 0
    %300 = vmatpush1.bf16.msra.mxu0 0
    %301 = vmatprep.subr.bf16.mxu0 0
    %302 = vmatpush1.bf16.msra.mxu0 0
    %303 = vmatprep.subr.bf16.mxu0 0
    %304 = vmatpush1.bf16.msra.mxu0 0
    %305 = vmatprep.subr.bf16.mxu0 0
    %306 = vmatpush1.bf16.msra.mxu0 0
    %307 = vmatprep.mubr.bf16.mxu0 0
    %308 = vmatmul.mubr.bf16.gmra.mrb[0].mxu0 %v41
    %v309 = vpop.f32.mrb[0].mxu0
    %v310 = vadd.f32 0.0, %v309
    %v311 = vpop.f32.mrb[0].mxu0
    %v312 = vadd.f32 0.0, %v311
    %v313 = vpop.f32.mrb[0].mxu0
    %v314 = vpop.f32.mrb[0].mxu0
    %315 = vdwg.mxu0
    %v316 = vadd.f32 %v37, %v269
    %v317 = vadd.f32 %v38, %v271
    %v318 = vadd.f32 %v39, %v310
    %v319 = vadd.f32 %v40, %v312
    %v320 = vxor.u32 %v316, 2147483648
    %v321 = vmul.f32 %v320, 1.442695
    %v322 = vpow.pop %v321
    %v323 = vadd.f32 %v322, 1.0
    %v324 = vrcp.pop %v323
    %v325 = vmul.f32 1.0, %v324
    %v326 = vxor.u32 %v317, 2147483648
    %v327 = vmul.f32 %v326, 1.442695
    %v328 = vpow.pop %v327
    %v329 = vadd.f32 %v328, 1.0
    %v330 = vrcp.pop %v329
    %v331 = vmul.f32 1.0, %v330
    %v332 = vtanh.pop %v318
    %v333 = vxor.u32 %v319, 2147483648
    %v334 = vmul.f32 %v333, 1.442695
    %v335 = vpow.pop %v334
    %v336 = vadd.f32 %v335, 1.0
    %v337 = vrcp.pop %v336
    %v338 = vmul.f32 1.0, %v337
    %v339 = vmul.f32 %v331, %v31
    %v340 = vmul.f32 %v325, %v332
    %v341 = vadd.f32 %v339, %v340
    %v342 = vtanh.pop %v341
    %v343 = vmul.f32 %v338, %v342
    %v344 = vstv %s33
    %vm345 = vcmp.lt.s32.totalorder %v344, %v21
    %v346 = vsel %vm345, 1, 0
    %347 = vset.pattern.permute.xlu0 0
    %348 = vperm.xlu0 %347, %v346
    %v349 = vpop.permute.xlu0 %348
    %vm350 = vcmp.eq.s32.totalorder %v349, 1
    %v351 = vsel %vm350, %v343, %v30
    %v352 = vsel %vm350, %v341, %v31
    %v353 = vsel %vm350, %v343, 0.0
    %s354 = smul.u32 %s25, 8
    %s355 = scalar_lea.vmem %s3, %s354
    %356 = vst [vmem:[%s355] sm:$0xff] %v353
  $region22: #{lstm_class_forward.6} parent=0 // loop_footer
    %s29 = sadd.s32 1, %s25
  $region23: #{lstm_class_forward.6} parent=0 // loop_footer_branch
    %24 = sbr.rel target = $region19
  $region24: #{lstm_class_forward.6} parent=0 // loop_exit
    _
  %357 = vst [vmem:[#allocation2] sm:$0xff] %v30
  %358 = vst [vmem:[#allocation3] sm:$0xff] %v31
  // Predicated region
  $region25: #{lstm_class_forward.6} parent=0 // pred_check
    _
  $region26: #{lstm_class_forward.6} parent=0 // pred_check_branch
    %360 = sbr.rel (0) target = $region28
  $region27: #{lstm_class_forward.6} parent=0 // pred_region
    _
  $region28: #{lstm_class_forward.6} parent=0 // pred_fallthru
    _
  // Predicated region
  $region29: #{lstm_class_forward.6} parent=0 // pred_check
    _
  $region30: #{lstm_class_forward.6} parent=0 // pred_check_branch
    %362 = sbr.rel (0) target = $region32
  $region31: #{lstm_class_forward.6} parent=0 // pred_region
    _
  $region32: #{lstm_class_forward.6} parent=0 // pred_fallthru
    _

// kernel: lstm_class_forward.5
$region0: #{lstm_class_forward.5}
  #allocation0 [shape = 'u32[]', space=smem, size = 0x4, offset = 0x4, fixed_abs, tag = 'smem constant byte address 0x4 - core index']
  #allocation1 [shape = 'u32[144,128]{1,0:T(1,128)}', space=vmem, size = 0x12000, scoped, tag = 'internal scratch']
  #allocation2 [shape = 'f32[64,256]{1,0:T(8,128)}', space=vmem, size = 0x10000, scoped, tag = 'scratch operand']
  %s0 = inlined_call_operand.vmem [shape: f32[64,128], index: 0, kind: input, shape index: {}]
  %s1 = inlined_call_operand.vmem [shape: bf16[128,512], index: 1, kind: input, shape index: {}]
  %s2 = inlined_call_operand.vmem [shape: f32[1,512], index: 2, kind: input, shape index: {}]
  %s3 = inlined_call_operand.vmem [shape: f32[64,512], index: 3, kind: output, shape index: {}]
  %s4 = sld [smem:[#allocation0]]
  $region110: #{lstm_class_forward.5} parent=0
    _
  %s6 = ssub.s32 1, %s4
  %s7 = scalar_select 0, %s6, %s4
  $region1: #{lstm_class_forward.5} parent=0
    #allocation3 [shape = 'u8[131072]{0}', space=vmem, size = 0x20000, scoped, tag = 'input window, operand 1']
    #allocation4 [shape = 'u8[131072]{0}', space=vmem, size = 0x20000, scoped, tag = 'output window, operand 0']
    loop: start=0, step=1, limit=4
    $region2: #{lstm_class_forward.5} parent=1 // loop_pre_header
      _
    $region3: #{lstm_class_forward.5} parent=1 // loop_header
      %s9 = sphi 0, %s13
      %p10 = scmp.ge.s32.totalorder %s9, 4
      %s16 = sphi 0, %s35
      %s17 = sphi 0, %s31
      %s18 = sphi 0, %s27
      %s19 = sphi 0, %s16
      %s20 = sphi 0, %s17
      %s21 = sphi 0, %s18
      %s22 = sphi 0, %s19
      %s23 = sphi 0, %s20
      %s24 = sphi 0, %s21
      %s40 = sphi 0, %s42
      %s43 = sphi 0, %s40
      %s44 = sphi 0, %s43
      %s60 = sphi 0, %s44
      %s68 = sphi 0, %s70
      %s71 = sphi 0, %s68
      %s72 = sphi 0, %s71
      %s88 = sphi 0, %s72
      %s94 = sphi 0, %s96
      %s97 = sphi 0, %s94
      %s98 = sphi 0, %s97
      %s114 = sphi 0, %s98
      %s122 = sphi 0, %s124
      %s125 = sphi 0, %s122
      %s126 = sphi 0, %s125
      %s142 = sphi 0, %s126
    $region4: #{lstm_class_forward.5} parent=1 // loop_header_branch
      %12 = sbr.rel (%p10) target = $region8
    $region5: #{lstm_class_forward.5} parent=1 // loop_body
      %s14 = ssub.s32 %s9, 1
      %s15 = ssub.s32 %s9, 2
      %s25 = sadd.s32 1, %s18
      %p26 = scmp.ge.s32.totalorder %s25, 1
      %s27 = scalar_select %p26, 0, %s25
      %s28 = sadd.s32 1, %s17
      %s29 = scalar_select %p26, %s28, %s17
      %p30 = scmp.ge.s32.totalorder %s29, 2
      %s31 = scalar_select %p30, 0, %s29
      %s32 = sadd.s32 1, %s16
      %s33 = scalar_select %p30, %s32, %s16
      %p34 = scmp.ge.s32.totalorder %s33, 1
      %s35 = scalar_select %p34, 0, %s33
      %s36 = ssub.s32 %s16, %s35
      %s37 = ssub.s32 %s18, %s27
      %s38 = sor.u32 %s36, %s37
      %p39 = scmp.eq.s32.totalorder %s38, 0
      %s41 = sadd.s32 %s40, 1
      %s42 = scalar_select %p39, %s40, %s41
      %p45 = pneg %p39
      %p46 = scmp.eq.s32.totalorder %s9, 1
      %p47 = por %p45, %p46
      %p48 = scmp.ne.s32.totalorder %s40, %s43
      %p49 = scmp.eq.s32.totalorder %s9, 0
      %p50 = por %p48, %p49
      %p51 = scmp.ne.s32.totalorder %s40, %s43
      %p52 = scmp.eq.s32.totalorder %s14, 1
      %p53 = por %p51, %p52
      %p54 = scmp.ne.s32.totalorder %s43, %s44
      %p55 = scmp.eq.s32.totalorder %s14, 0
      %p56 = por %p54, %p55
      %p57 = scmp.ne.s32.totalorder %s43, %s44
      %p58 = scmp.eq.s32.totalorder %s15, 1
      %p59 = por %p57, %p58
      %p61 = scmp.ne.s32.totalorder %s44, %s60
      %p62 = scmp.eq.s32.totalorder %s15, 0
      %p63 = por %p61, %p62
      %s64 = ssub.s32 %s18, %s27
      %s65 = ssub.s32 %s17, %s31
      %s66 = sor.u32 %s64, %s65
      %p67 = scmp.eq.s32.totalorder %s66, 0
      %s69 = sadd.s32 %s68, 1
      %s70 = scalar_select %p67, %s68, %s69
      %p73 = pneg %p67
      %p74 = scmp.eq.s32.totalorder %s9, 1
      %p75 = por %p73, %p74
      %p76 = scmp.ne.s32.totalorder %s68, %s71
      %p77 = scmp.eq.s32.totalorder %s9, 0
      %p78 = por %p76, %p77
      %p79 = scmp.ne.s32.totalorder %s68, %s71
      %p80 = scmp.eq.s32.totalorder %s14, 1
      %p81 = por %p79, %p80
      %p82 = scmp.ne.s32.totalorder %s71, %s72
      %p83 = scmp.eq.s32.totalorder %s14, 0
      %p84 = por %p82, %p83
      %p85 = scmp.ne.s32.totalorder %s71, %s72
      %p86 = scmp.eq.s32.totalorder %s15, 1
      %p87 = por %p85, %p86
      %p89 = scmp.ne.s32.totalorder %s72, %s88
      %p90 = scmp.eq.s32.totalorder %s15, 0
      %p91 = por %p89, %p90
      %s92 = ssub.s32 %s17, %s31
      %p93 = scmp.eq.s32.totalorder %s92, 0
      %s95 = sadd.s32 %s94, 1
      %s96 = scalar_select %p93, %s94, %s95
      %p99 = pneg %p93
      %p100 = scmp.eq.s32.totalorder %s9, 1
      %p101 = por %p99, %p100
      %p102 = scmp.ne.s32.totalorder %s94, %s97
      %p103 = scmp.eq.s32.totalorder %s9, 0
      %p104 = por %p102, %p103
      %p105 = scmp.ne.s32.totalorder %s94, %s97
      %p106 = scmp.eq.s32.totalorder %s14, 1
      %p107 = por %p105, %p106
      %p108 = scmp.ne.s32.totalorder %s97, %s98
      %p109 = scmp.eq.s32.totalorder %s14, 0
      %p110 = por %p108, %p109
      %p111 = scmp.ne.s32.totalorder %s97, %s98
      %p112 = scmp.eq.s32.totalorder %s15, 1
      %p113 = por %p111, %p112
      %p115 = scmp.ne.s32.totalorder %s98, %s114
      %p116 = scmp.eq.s32.totalorder %s15, 0
      %p117 = por %p115, %p116
      %s118 = ssub.s32 %s16, %s35
      %s119 = ssub.s32 %s17, %s31
      %s120 = sor.u32 %s118, %s119
      %p121 = scmp.eq.s32.totalorder %s120, 0
      %s123 = sadd.s32 %s122, 1
      %s124 = scalar_select %p121, %s122, %s123
      %p127 = pneg %p121
      %p128 = scmp.eq.s32.totalorder %s9, 1
      %p129 = por %p127, %p128
      %p130 = scmp.ne.s32.totalorder %s122, %s125
      %p131 = scmp.eq.s32.totalorder %s9, 0
      %p132 = por %p130, %p131
      %p133 = scmp.ne.s32.totalorder %s122, %s125
      %p134 = scmp.eq.s32.totalorder %s14, 1
      %p135 = por %p133, %p134
      %p136 = scmp.ne.s32.totalorder %s125, %s126
      %p137 = scmp.eq.s32.totalorder %s14, 0
      %p138 = por %p136, %p137
      %p139 = scmp.ne.s32.totalorder %s125, %s126
      %p140 = scmp.eq.s32.totalorder %s15, 1
      %p141 = por %p139, %p140
      %p143 = scmp.ne.s32.totalorder %s126, %s142
      %p144 = scmp.eq.s32.totalorder %s15, 0
      %p145 = por %p143, %p144
      %p146 = scmp.le.s32.totalorder 1, %s9
      %p147 = scmp.lt.s32.totalorder %s9, 3
      %p148 = pnand %p146, %p147
      %p149 = pneg %p148
      // Predicated region
      $region9: #{lstm_class_forward.5} parent=5 // pred_check
        _
      $region10: #{lstm_class_forward.5} parent=5 // pred_check_branch
        %151 = sbr.rel (%p148) target = $region12
      $region11: #{lstm_class_forward.5} parent=5 // pred_region
        %s152 = ssub.s32 %s9, 1
        // Predicated region
        $region13: #{lstm_class_forward.5} parent=11 // pred_check
          %p153 = pneg %p56
        $region14: #{lstm_class_forward.5} parent=11 // pred_check_branch
          %155 = sbr.rel (%p153) target = $region16
        $region15: #{lstm_class_forward.5} parent=11 // pred_region
          %s156 = smul.u32 8, %s19
          %p157 = scmp.lt.s32.totalorder %s156, 7
          %s158 = scalar_select %p157, %s156, 7
          %p159 = scmp.lt.s32.totalorder %s21, 0
          %s160 = scalar_select %p159, %s21, 0
          %s161 = sadd.s32 %s160, %s158
          %s162 = smul.addr %s161, 8
          %s163 = scalar_lea.vmem %s0, %s162
          %s164 = smul.u32 8, %s19
        $region16: #{lstm_class_forward.5} parent=11 // pred_fallthru
          _
      $region12: #{lstm_class_forward.5} parent=5 // pred_fallthru
        _
      %p165 = scmp.lt.s32.totalorder %s9, 2
      // Predicated region
      $region17: #{lstm_class_forward.5} parent=5 // pred_check
        %p166 = pneg %p165
      $region18: #{lstm_class_forward.5} parent=5 // pred_check_branch
        %168 = sbr.rel (%p166) target = $region20
      $region19: #{lstm_class_forward.5} parent=5 // pred_region
        // Predicated region
        $region21: #{lstm_class_forward.5} parent=19 // pred_check
          %p169 = pneg %p78
        $region22: #{lstm_class_forward.5} parent=19 // pred_check_branch
          %171 = sbr.rel (%p169) target = $region24
        $region23: #{lstm_class_forward.5} parent=19 // pred_region
          %s172 = sand.u32 %s68, 1
          %s173 = sand.u32 %s68, 1
          %s174 = smul.addr %s173, 128
          %s175 = scalar_lea.vmem [#allocation3], %s174
          %s176 = smul.u32 16, %s18
          %s177 = smul.u32 2, %s17
          %s178 = smul.addr %s176, 4
          %s179 = sadd.s32 %s177, %s178
          %s180 = smul.addr %s179, 4
          %s181 = scalar_lea.vmem %s1, %s180
          // Predicated region
          $region25: #{lstm_class_forward.5} parent=23 // pred_check
            _
          $region26: #{lstm_class_forward.5} parent=23 // pred_check_branch
            %183 = sbr.rel (0) target = $region28
          $region27: #{lstm_class_forward.5} parent=23 // pred_region
            // Predicated region
            $region29: #{lstm_class_forward.5} parent=27 // pred_check
              _
            $region30: #{lstm_class_forward.5} parent=27 // pred_check_branch
              %185 = sbr.rel (0) target = $region32
            $region31: #{lstm_class_forward.5} parent=27 // pred_region
              // Predicated region
              $region44: #{lstm_class_forward.5} parent=31 // pred_check
                _
              $region45: #{lstm_class_forward.5} parent=31 // pred_check_branch
                %230 = sbr.rel (0) target = $region47
              $region46: #{lstm_class_forward.5} parent=31 // pred_region
                loop: start=0, step=1, limit=1
                $region48: #{lstm_class_forward.5} parent=46 // loop_pre_header
                  _
                $region49: #{lstm_class_forward.5} parent=46 // loop_header
                  %s232 = sphi 0, %s236
                  %p233 = scmp.ge.s32.totalorder %s232, 1
                  %s237 = sphi %s181, %s181
                  %s238 = sphi %s175, %s175
                $region50: #{lstm_class_forward.5} parent=46 // loop_header_branch
                  %235 = sbr.rel (%p233) target = $region54
                $region51: #{lstm_class_forward.5} parent=46 // loop_body
                  %v239 = vld [vmem:[%s237] sm:$0xff]
                  %240 = vst [vmem:[%s238] sm:$0xff] %v239
                  %v241 = vld [vmem:[%s237 + $0x10] sm:$0xff]
                  %242 = vst [vmem:[%s238 + $0x8] sm:$0xff] %v241
                  %v243 = vld [vmem:[%s237 + $0x20] sm:$0xff]
                  %244 = vst [vmem:[%s238 + $0x10] sm:$0xff] %v243
                  %v245 = vld [vmem:[%s237 + $0x30] sm:$0xff]
                  %246 = vst [vmem:[%s238 + $0x18] sm:$0xff] %v245
                  %v247 = vld [vmem:[%s237 + $0x40] sm:$0xff]
                  %248 = vst [vmem:[%s238 + $0x20] sm:$0xff] %v247
                  %v249 = vld [vmem:[%s237 + $0x50] sm:$0xff]
                  %250 = vst [vmem:[%s238 + $0x28] sm:$0xff] %v249
                  %v251 = vld [vmem:[%s237 + $0x60] sm:$0xff]
                  %252 = vst [vmem:[%s238 + $0x30] sm:$0xff] %v251
                  %v253 = vld [vmem:[%s237 + $0x70] sm:$0xff]
                  %254 = vst [vmem:[%s238 + $0x38] sm:$0xff] %v253
                  %v255 = vld [vmem:[%s237 + $0x80] sm:$0xff]
                  %256 = vst [vmem:[%s238 + $0x40] sm:$0xff] %v255
                  %v257 = vld [vmem:[%s237 + $0x90] sm:$0xff]
                  %258 = vst [vmem:[%s238 + $0x48] sm:$0xff] %v257
                  %v259 = vld [vmem:[%s237 + $0xa0] sm:$0xff]
                  %260 = vst [vmem:[%s238 + $0x50] sm:$0xff] %v259
                  %v261 = vld [vmem:[%s237 + $0xb0] sm:$0xff]
                  %262 = vst [vmem:[%s238 + $0x58] sm:$0xff] %v261
                  %v263 = vld [vmem:[%s237 + $0xc0] sm:$0xff]
                  %264 = vst [vmem:[%s238 + $0x60] sm:$0xff] %v263
                  %v265 = vld [vmem:[%s237 + $0xd0] sm:$0xff]
                  %266 = vst [vmem:[%s238 + $0x68] sm:$0xff] %v265
                  %v267 = vld [vmem:[%s237 + $0xe0] sm:$0xff]
                  %268 = vst [vmem:[%s238 + $0x70] sm:$0xff] %v267
                  %v269 = vld [vmem:[%s237 + $0xf0] sm:$0xff]
                  %270 = vst [vmem:[%s238 + $0x78] sm:$0xff] %v269
                $region52: #{lstm_class_forward.5} parent=46 // loop_footer
                  %s236 = sadd.s32 1, %s232
                $region53: #{lstm_class_forward.5} parent=46 // loop_footer_branch
                  %231 = sbr.rel target = $region49
                $region54: #{lstm_class_forward.5} parent=46 // loop_exit
                  _
              $region47: #{lstm_class_forward.5} parent=31 // pred_fallthru
                _
              // Predicated region
              $region55: #{lstm_class_forward.5} parent=31 // pred_check
                _
              $region56: #{lstm_class_forward.5} parent=31 // pred_check_branch
                %272 = sbr.rel target = $region58
              $region57: #{lstm_class_forward.5} parent=31 // pred_region
                _
              $region58: #{lstm_class_forward.5} parent=31 // pred_fallthru
                _
            $region32: #{lstm_class_forward.5} parent=27 // pred_fallthru
              _
            // Predicated region
            $region33: #{lstm_class_forward.5} parent=27 // pred_check
              _
            $region34: #{lstm_class_forward.5} parent=27 // pred_check_branch
              %187 = sbr.rel target = $region36
            $region35: #{lstm_class_forward.5} parent=27 // pred_region
              loop: start=0, step=1, limit=1
              $region37: #{lstm_class_forward.5} parent=35 // loop_pre_header
                _
              $region38: #{lstm_class_forward.5} parent=35 // loop_header
                %s190 = sphi 0, %s194
                %p191 = scmp.ge.s32.totalorder %s190, 1
                %s195 = sphi %s181, %s181
                %s196 = sphi %s175, %s175
              $region39: #{lstm_class_forward.5} parent=35 // loop_header_branch
                %193 = sbr.rel (%p191) target = $region43
              $region40: #{lstm_class_forward.5} parent=35 // loop_body
                %v197 = vld [vmem:[%s195] sm:$0xff]
                %198 = vst [vmem:[%s196] sm:$0xff] %v197
                %v199 = vld [vmem:[%s195 + $0x10] sm:$0xff]
                %200 = vst [vmem:[%s196 + $0x8] sm:$0xff] %v199
                %v201 = vld [vmem:[%s195 + $0x20] sm:$0xff]
                %202 = vst [vmem:[%s196 + $0x10] sm:$0xff] %v201
                %v203 = vld [vmem:[%s195 + $0x30] sm:$0xff]
                %204 = vst [vmem:[%s196 + $0x18] sm:$0xff] %v203
                %v205 = vld [vmem:[%s195 + $0x40] sm:$0xff]
                %206 = vst [vmem:[%s196 + $0x20] sm:$0xff] %v205
                %v207 = vld [vmem:[%s195 + $0x50] sm:$0xff]
                %208 = vst [vmem:[%s196 + $0x28] sm:$0xff] %v207
                %v209 = vld [vmem:[%s195 + $0x60] sm:$0xff]
                %210 = vst [vmem:[%s196 + $0x30] sm:$0xff] %v209
                %v211 = vld [vmem:[%s195 + $0x70] sm:$0xff]
                %212 = vst [vmem:[%s196 + $0x38] sm:$0xff] %v211
                %v213 = vld [vmem:[%s195 + $0x80] sm:$0xff]
                %214 = vst [vmem:[%s196 + $0x40] sm:$0xff] %v213
                %v215 = vld [vmem:[%s195 + $0x90] sm:$0xff]
                %216 = vst [vmem:[%s196 + $0x48] sm:$0xff] %v215
                %v217 = vld [vmem:[%s195 + $0xa0] sm:$0xff]
                %218 = vst [vmem:[%s196 + $0x50] sm:$0xff] %v217
                %v219 = vld [vmem:[%s195 + $0xb0] sm:$0xff]
                %220 = vst [vmem:[%s196 + $0x58] sm:$0xff] %v219
                %v221 = vld [vmem:[%s195 + $0xc0] sm:$0xff]
                %222 = vst [vmem:[%s196 + $0x60] sm:$0xff] %v221
                %v223 = vld [vmem:[%s195 + $0xd0] sm:$0xff]
                %224 = vst [vmem:[%s196 + $0x68] sm:$0xff] %v223
                %v225 = vld [vmem:[%s195 + $0xe0] sm:$0xff]
                %226 = vst [vmem:[%s196 + $0x70] sm:$0xff] %v225
                %v227 = vld [vmem:[%s195 + $0xf0] sm:$0xff]
                %228 = vst [vmem:[%s196 + $0x78] sm:$0xff] %v227
              $region41: #{lstm_class_forward.5} parent=35 // loop_footer
                %s194 = sadd.s32 1, %s190
              $region42: #{lstm_class_forward.5} parent=35 // loop_footer_branch
                %189 = sbr.rel target = $region38
              $region43: #{lstm_class_forward.5} parent=35 // loop_exit
                _
            $region36: #{lstm_class_forward.5} parent=27 // pred_fallthru
              _
          $region28: #{lstm_class_forward.5} parent=23 // pred_fallthru
            _
          %273 = vnop
        $region24: #{lstm_class_forward.5} parent=19 // pred_fallthru
          _
        // Predicated region
        $region59: #{lstm_class_forward.5} parent=19 // pred_check
          %p274 = pneg %p104
        $region60: #{lstm_class_forward.5} parent=19 // pred_check_branch
          %276 = sbr.rel (%p274) target = $region62
        $region61: #{lstm_class_forward.5} parent=19 // pred_region
          %s277 = smul.u32 2, %s17
          %p278 = scmp.lt.s32.totalorder %s277, 3
          %s279 = scalar_select %p278, %s277, 3
          %s280 = scalar_lea.vmem %s2, %s279
          %s281 = smul.u32 2, %s17
        $region62: #{lstm_class_forward.5} parent=19 // pred_fallthru
          _
      $region20: #{lstm_class_forward.5} parent=5 // pred_fallthru
        _
      %p282 = scmp.le.s32.totalorder 1, %s9
      %p283 = scmp.lt.s32.totalorder %s9, 3
      %p284 = pnand %p282, %p283
      %p285 = pneg %p284
      // Predicated region
      $region63: #{lstm_class_forward.5} parent=5 // pred_check
        _
      $region64: #{lstm_class_forward.5} parent=5 // pred_check_branch
        %287 = sbr.rel (%p284) target = $region66
      $region65: #{lstm_class_forward.5} parent=5 // pred_region
        %s288 = ssub.s32 %s9, 1
        %s289 = sand.u32 %s71, 1
        %s290 = sand.u32 %s71, 1
        %s291 = smul.addr %s290, 128
        %s292 = scalar_lea.vmem [#allocation3], %s291
        // Predicated region
        $region67: #{lstm_class_forward.5} parent=65 // pred_check
          %p293 = pneg %p84
        $region68: #{lstm_class_forward.5} parent=65 // pred_check_branch
          %295 = sbr.rel (%p293) target = $region70
        $region69: #{lstm_class_forward.5} parent=65 // pred_region
          _
        $region70: #{lstm_class_forward.5} parent=65 // pred_fallthru
          _
        %s296 = smul.u32 8, %s19
        %p297 = scmp.lt.s32.totalorder %s296, 7
        %s298 = scalar_select %p297, %s296, 7
        %p299 = scmp.lt.s32.totalorder %s21, 0
        %s300 = scalar_select %p299, %s21, 0
        %s301 = sadd.s32 %s300, %s298
        %s302 = smul.addr %s301, 8
        %s303 = scalar_lea.vmem %s0, %s302
        %p304 = pneg %p56
        %p305 = pneg %p53
        %s306 = sand.u32 %s71, 1
        %s307 = sand.u32 %s71, 1
        %s308 = smul.addr %s307, 128
        %s309 = scalar_lea.vmem [#allocation3], %s308
        %p310 = pneg %p84
        %p311 = pneg %p81
        %s312 = smul.u32 2, %s20
        %p313 = scmp.lt.s32.totalorder %s312, 3
        %s314 = scalar_select %p313, %s312, 3
        %s315 = scalar_lea.vmem %s2, %s314
        %p316 = pneg %p110
        %p317 = pneg %p107
        %p318 = pneg %p138
        %p319 = pneg %p135
        %s320 = sand.u32 %s125, 1
        %s321 = sand.u32 %s125, 1
        %s322 = smul.addr %s321, 128
        %s323 = scalar_lea.vmem [#allocation4], %s322
        %s324 = smul.u32 8, %s19
        %p325 = scmp.lt.s32.totalorder %s324, 7
        %s326 = scalar_select %p325, %s324, 7
        %p327 = scmp.lt.s32.totalorder %s21, 0
        %s328 = scalar_select %p327, %s21, 0
        %s329 = sadd.s32 %s328, %s326
        %s330 = smul.addr %s329, 8
        %s331 = scalar_lea.vmem %s0, %s330
        %s332 = smul.u32 8, %s19
        %s333 = smul.u32 16, %s21
        %s334 = smul.u32 2, %s20
        %s335 = smul.u32 2, %s20
        %p336 = scmp.lt.s32.totalorder %s335, 3
        %s337 = scalar_select %p336, %s335, 3
        %s338 = scalar_lea.vmem %s2, %s337
        %s339 = smul.u32 2, %s20
        %s340 = smul.u32 8, %s19
        %s341 = smul.u32 2, %s20
        %p343 = scmp.eq.s32.totalorder %s21, 0
        // Predicated region
        $region71: #{lstm_class_forward.5} parent=65 // pred_check
          %p344 = pneg %p343
        $region72: #{lstm_class_forward.5} parent=65 // pred_check_branch
          %346 = sbr.rel (%p344) target = $region74
        $region73: #{lstm_class_forward.5} parent=65 // pred_region
          %347 = vst [vmem:[#allocation2] sm:$0xff] 0.0
          %348 = vst [vmem:[#allocation2 + $0x8] sm:$0xff] 0.0
          %349 = vst [vmem:[#allocation2 + $0x10] sm:$0xff] 0.0
          %350 = vst [vmem:[#allocation2 + $0x18] sm:$0xff] 0.0
          %351 = vst [vmem:[#allocation2 + $0x20] sm:$0xff] 0.0
          %352 = vst [vmem:[#allocation2 + $0x28] sm:$0xff] 0.0
          %353 = vst [vmem:[#allocation2 + $0x30] sm:$0xff] 0.0
          %354 = vst [vmem:[#allocation2 + $0x38] sm:$0xff] 0.0
          %355 = vst [vmem:[#allocation2 + $0x40] sm:$0xff] 0.0
          %356 = vst [vmem:[#allocation2 + $0x48] sm:$0xff] 0.0
          %357 = vst [vmem:[#allocation2 + $0x50] sm:$0xff] 0.0
          %358 = vst [vmem:[#allocation2 + $0x58] sm:$0xff] 0.0
          %359 = vst [vmem:[#allocation2 + $0x60] sm:$0xff] 0.0
          %360 = vst [vmem:[#allocation2 + $0x68] sm:$0xff] 0.0
          %361 = vst [vmem:[#allocation2 + $0x70] sm:$0xff] 0.0
          %362 = vst [vmem:[#allocation2 + $0x78] sm:$0xff] 0.0
        $region74: #{lstm_class_forward.5} parent=65 // pred_fallthru
          _
        %v363 = vld [vmem:[#allocation2] sm:$0xff]
        %v364 = vld [vmem:[#allocation2 + $0x8] sm:$0xff]
        %v365 = vld [vmem:[#allocation2 + $0x10] sm:$0xff]
        %v366 = vld [vmem:[#allocation2 + $0x18] sm:$0xff]
        %v367 = vld [vmem:[#allocation2 + $0x20] sm:$0xff]
        %v368 = vld [vmem:[#allocation2 + $0x28] sm:$0xff]
        %v369 = vld [vmem:[#allocation2 + $0x30] sm:$0xff]
        %v370 = vld [vmem:[#allocation2 + $0x38] sm:$0xff]
        %v371 = vld [vmem:[#allocation2 + $0x40] sm:$0xff]
        %v372 = vld [vmem:[#allocation2 + $0x48] sm:$0xff]
        %v373 = vld [vmem:[#allocation2 + $0x50] sm:$0xff]
        %v374 = vld [vmem:[#allocation2 + $0x58] sm:$0xff]
        %v375 = vld [vmem:[#allocation2 + $0x60] sm:$0xff]
        %v376 = vld [vmem:[#allocation2 + $0x68] sm:$0xff]
        %v377 = vld [vmem:[#allocation2 + $0x70] sm:$0xff]
        %v378 = vld [vmem:[#allocation2 + $0x78] sm:$0xff]
        %v379 = vld [vmem:[%s331] sm:$0xff]
        %v380 = vld [vmem:[%s331 + $0x8] sm:$0xff]
        %v381 = vld [vmem:[%s331 + $0x10] sm:$0xff]
        %v382 = vld [vmem:[%s331 + $0x18] sm:$0xff]
        %v383 = vld [vmem:[%s331 + $0x20] sm:$0xff]
        %v384 = vld [vmem:[%s331 + $0x28] sm:$0xff]
        %v385 = vld [vmem:[%s331 + $0x30] sm:$0xff]
        %v386 = vld [vmem:[%s331 + $0x38] sm:$0xff]
        %v387 = vpack.c.bf16 %v380, %v379
        %v388 = vpack.c.bf16 %v382, %v381
        %v389 = vpack.c.bf16 %v384, %v383
        %v390 = vpack.c.bf16 %v386, %v385
        %v391 = vld [vmem:[%s292] sm:$0xff]
        %v392 = vld [vmem:[%s292 + $0x8] sm:$0xff]
        %v393 = vld [vmem:[%s292 + $0x10] sm:$0xff]
        %v394 = vld [vmem:[%s292 + $0x18] sm:$0xff]
        %v395 = vld [vmem:[%s292 + $0x20] sm:$0xff]
        %v396 = vld [vmem:[%s292 + $0x28] sm:$0xff]
        %v397 = vld [vmem:[%s292 + $0x30] sm:$0xff]
        %v398 = vld [vmem:[%s292 + $0x38] sm:$0xff]
        %v399 = vld [vmem:[%s292 + $0x40] sm:$0xff]
        %v400 = vld [vmem:[%s292 + $0x48] sm:$0xff]
        %v401 = vld [vmem:[%s292 + $0x50] sm:$0xff]
        %v402 = vld [vmem:[%s292 + $0x58] sm:$0xff]
        %v403 = vld [vmem:[%s292 + $0x60] sm:$0xff]
        %v404 = vld [vmem:[%s292 + $0x68] sm:$0xff]
        %v405 = vld [vmem:[%s292 + $0x70] sm:$0xff]
        %v406 = vld [vmem:[%s292 + $0x78] sm:$0xff]
        %v423 = vunpack.c.l.b16 %v391
        %v424 = vunpack.c.h.b16 %v391
        %v425 = vunpack.c.l.b16 %v392
        %v426 = vunpack.c.h.b16 %v392
        %v427 = vunpack.c.l.b16 %v393
        %v428 = vunpack.c.h.b16 %v393
        %v429 = vunpack.c.l.b16 %v394
        %v430 = vunpack.c.h.b16 %v394
        %v431 = vunpack.c.l.b16 %v395
        %v432 = vunpack.c.h.b16 %v395
        %v433 = vunpack.c.l.b16 %v396
        %v434 = vunpack.c.h.b16 %v396
        %v435 = vunpack.c.l.b16 %v397
        %v436 = vunpack.c.h.b16 %v397
        %v437 = vunpack.c.l.b16 %v398
        %v438 = vunpack.c.h.b16 %v398
        %v439 = vunpack.c.l.b16 %v399
        %v440 = vunpack.c.h.b16 %v399
        %v441 = vunpack.c.l.b16 %v400
        %v442 = vunpack.c.h.b16 %v400
        %v443 = vunpack.c.l.b16 %v401
        %v444 = vunpack.c.h.b16 %v401
        %v445 = vunpack.c.l.b16 %v402
        %v446 = vunpack.c.h.b16 %v402
        %v447 = vunpack.c.l.b16 %v403
        %v448 = vunpack.c.h.b16 %v403
        %v449 = vunpack.c.l.b16 %v404
        %v450 = vunpack.c.h.b16 %v404
        %v451 = vunpack.c.l.b16 %v405
        %v452 = vunpack.c.h.b16 %v405
        %v453 = vunpack.c.l.b16 %v406
        %v454 = vunpack.c.h.b16 %v406
        %v455 = vpack.c.b16 %v425, %v423
        %v456 = vpack.c.b16 %v426, %v424
        %v457 = vpack.c.b16 %v429, %v427
        %v458 = vpack.c.b16 %v430, %v428
        %v459 = vpack.c.b16 %v433, %v431
        %v460 = vpack.c.b16 %v434, %v432
        %v461 = vpack.c.b16 %v437, %v435
        %v462 = vpack.c.b16 %v438, %v436
        %v463 = vpack.c.b16 %v441, %v439
        %v464 = vpack.c.b16 %v442, %v440
        %v465 = vpack.c.b16 %v445, %v443
        %v466 = vpack.c.b16 %v446, %v444
        %v467 = vpack.c.b16 %v449, %v447
        %v468 = vpack.c.b16 %v450, %v448
        %v469 = vpack.c.b16 %v453, %v451
        %v470 = vpack.c.b16 %v454, %v452
        %487 = vmatprep.subr.bf16.mxu0 %v456
        %488 = vmatpush1.bf16.msra.mxu0 %v455
        %489 = vmatprep.subr.bf16.mxu0 %v458
        %490 = vmatpush1.bf16.msra.mxu0 %v457
        %491 = vmatprep.subr.bf16.mxu0 %v460
        %492 = vmatpush1.bf16.msra.mxu0 %v459
        %493 = vmatprep.subr.bf16.mxu0 %v462
        %494 = vmatpush1.bf16.msra.mxu0 %v461
        %495 = vmatprep.subr.bf16.mxu0 %v464
        %496 = vmatpush1.bf16.msra.mxu0 %v463
        %497 = vmatprep.subr.bf16.mxu0 %v466
        %498 = vmatpush1.bf16.msra.mxu0 %v465
        %499 = vmatprep.subr.bf16.mxu0 %v468
        %500 = vmatpush1.bf16.msra.mxu0 %v467
        %501 = vmatprep.subr.bf16.mxu0 %v470
        %502 = vmatpush1.bf16.msra.mxu0 %v469
        %503 = vmatprep.subr.bf16.mxu0 0
        %504 = vmatpush1.bf16.msra.mxu0 0
        %505 = vmatprep.subr.bf16.mxu0 0
        %506 = vmatpush1.bf16.msra.mxu0 0
        %507 = vmatprep.subr.bf16.mxu0 0
        %508 = vmatpush1.bf16.msra.mxu0 0
        %509 = vmatprep.subr.bf16.mxu0 0
        %510 = vmatpush1.bf16.msra.mxu0 0
        %511 = vmatprep.subr.bf16.mxu0 0
        %512 = vmatpush1.bf16.msra.mxu0 0
        %513 = vmatprep.subr.bf16.mxu0 0
        %514 = vmatpush1.bf16.msra.mxu0 0
        %515 = vmatprep.subr.bf16.mxu0 0
        %516 = vmatpush1.bf16.msra.mxu0 0
        %517 = vmatprep.subr.bf16.mxu0 0
        %518 = vmatpush1.bf16.msra.mxu0 0
        %519 = vmatprep.mubr.bf16.mxu0 0
        %520 = vmatmul.mubr.bf16.gmra.mrb[0].mxu0 %v387
        %v521 = vpop.f32.mrb[0].mxu0
        %v522 = vadd.f32 0.0, %v521
        %v523 = vpop.f32.mrb[0].mxu0
        %v524 = vadd.f32 0.0, %v523
        %v525 = vpop.f32.mrb[0].mxu0
        %v526 = vadd.f32 0.0, %v525
        %v527 = vpop.f32.mrb[0].mxu0
        %v528 = vadd.f32 0.0, %v527
        %529 = vmatprep.mubr.bf16.mxu0 0
        %530 = vmatmul.mubr.bf16.gmra.mrb[0].mxu0 %v388
        %v531 = vpop.f32.mrb[0].mxu0
        %v532 = vadd.f32 0.0, %v531
        %v533 = vpop.f32.mrb[0].mxu0
        %v534 = vadd.f32 0.0, %v533
        %v535 = vpop.f32.mrb[0].mxu0
        %v536 = vadd.f32 0.0, %v535
        %v537 = vpop.f32.mrb[0].mxu0
        %v538 = vadd.f32 0.0, %v537
        %539 = vmatprep.mubr.bf16.mxu0 0
        %540 = vmatmul.mubr.bf16.gmra.mrb[0].mxu0 %v389
        %v541 = vpop.f32.mrb[0].mxu0
        %v542 = vadd.f32 0.0, %v541
        %v543 = vpop.f32.mrb[0].mxu0
        %v544 = vadd.f32 0.0, %v543
        %v545 = vpop.f32.mrb[0].mxu0
        %v546 = vadd.f32 0.0, %v545
        %v547 = vpop.f32.mrb[0].mxu0
        %v548 = vadd.f32 0.0, %v547
        %549 = vmatprep.mubr.bf16.mxu0 0
        %550 = vmatmul.mubr.bf16.gmra.mrb[0].mxu0 %v390
        %v551 = vpop.f32.mrb[0].mxu0
        %v552 = vadd.f32 0.0, %v551
        %v553 = vpop.f32.mrb[0].mxu0
        %v554 = vadd.f32 0.0, %v553
        %v555 = vpop.f32.mrb[0].mxu0
        %v556 = vadd.f32 0.0, %v555
        %v557 = vpop.f32.mrb[0].mxu0
        %v558 = vadd.f32 0.0, %v557
        %559 = vdwg.mxu0
        %v560 = vadd.f32 %v363, %v522
        %v561 = vadd.f32 %v364, %v524
        %v562 = vadd.f32 %v365, %v526
        %v563 = vadd.f32 %v366, %v528
        %v564 = vadd.f32 %v367, %v532
        %v565 = vadd.f32 %v368, %v534
        %v566 = vadd.f32 %v369, %v536
        %v567 = vadd.f32 %v370, %v538
        %v568 = vadd.f32 %v371, %v542
        %v569 = vadd.f32 %v372, %v544
        %v570 = vadd.f32 %v373, %v546
        %v571 = vadd.f32 %v374, %v548
        %v572 = vadd.f32 %v375, %v552
        %v573 = vadd.f32 %v376, %v554
        %v574 = vadd.f32 %v377, %v556
        %v575 = vadd.f32 %v378, %v558
        %576 = vst [vmem:[#allocation2] sm:$0xff] %v560
        %577 = vst [vmem:[#allocation2 + $0x8] sm:$0xff] %v561
        %578 = vst [vmem:[#allocation2 + $0x10] sm:$0xff] %v562
        %579 = vst [vmem:[#allocation2 + $0x18] sm:$0xff] %v563
        %580 = vst [vmem:[#allocation2 + $0x20] sm:$0xff] %v564
        %581 = vst [vmem:[#allocation2 + $0x28] sm:$0xff] %v565
        %582 = vst [vmem:[#allocation2 + $0x30] sm:$0xff] %v566
        %583 = vst [vmem:[#allocation2 + $0x38] sm:$0xff] %v567
        %584 = vst [vmem:[#allocation2 + $0x40] sm:$0xff] %v568
        %585 = vst [vmem:[#allocation2 + $0x48] sm:$0xff] %v569
        %586 = vst [vmem:[#allocation2 + $0x50] sm:$0xff] %v570
        %587 = vst [vmem:[#allocation2 + $0x58] sm:$0xff] %v571
        %588 = vst [vmem:[#allocation2 + $0x60] sm:$0xff] %v572
        %589 = vst [vmem:[#allocation2 + $0x68] sm:$0xff] %v573
        %590 = vst [vmem:[#allocation2 + $0x70] sm:$0xff] %v574
        %591 = vst [vmem:[#allocation2 + $0x78] sm:$0xff] %v575
        // Predicated region
        $region75: #{lstm_class_forward.5} parent=65 // pred_check
          %p592 = pneg %p343
        $region76: #{lstm_class_forward.5} parent=65 // pred_check_branch
          %594 = sbr.rel (%p592) target = $region78
        $region77: #{lstm_class_forward.5} parent=65 // pred_region
          %v595 = vld [vmem:[#allocation2] sm:$0xff]
          %v596 = vld [vmem:[#allocation2 + $0x8] sm:$0xff]
          %v597 = vld [vmem:[#allocation2 + $0x10] sm:$0xff]
          %v598 = vld [vmem:[#allocation2 + $0x18] sm:$0xff]
          %v599 = vld [vmem:[#allocation2 + $0x20] sm:$0xff]
          %v600 = vld [vmem:[#allocation2 + $0x28] sm:$0xff]
          %v601 = vld [vmem:[#allocation2 + $0x30] sm:$0xff]
          %v602 = vld [vmem:[#allocation2 + $0x38] sm:$0xff]
          %v603 = vld [vmem:[#allocation2 + $0x40] sm:$0xff]
          %v604 = vld [vmem:[#allocation2 + $0x48] sm:$0xff]
          %v605 = vld [vmem:[#allocation2 + $0x50] sm:$0xff]
          %v606 = vld [vmem:[#allocation2 + $0x58] sm:$0xff]
          %v607 = vld [vmem:[#allocation2 + $0x60] sm:$0xff]
          %v608 = vld [vmem:[#allocation2 + $0x68] sm:$0xff]
          %v609 = vld [vmem:[#allocation2 + $0x70] sm:$0xff]
          %v610 = vld [vmem:[#allocation2 + $0x78] sm:$0xff]
          %v611 = vld [vmem:[%s338] sm:$0x3]
          %v613 = vlaneseq
          %v614 = vshrl.u32 %v613, 7
          %v615 = vsub.s32 0, %v614
          %v616 = vrot.slane %v611, %v615
          %v617 = vlaneseq
          %v618 = vshrl.u32 %v617, 7
          %v619 = vsub.s32 1, %v618
          %v620 = vrot.slane %v611, %v619
          %v623 = vadd.f32 %v595, %v616
          %v624 = vadd.f32 %v596, %v620
          %v625 = vadd.f32 %v597, %v616
          %v626 = vadd.f32 %v598, %v620
          %v627 = vadd.f32 %v599, %v616
          %v628 = vadd.f32 %v600, %v620
          %v629 = vadd.f32 %v601, %v616
          %v630 = vadd.f32 %v602, %v620
          %v631 = vadd.f32 %v603, %v616
          %v632 = vadd.f32 %v604, %v620
          %v633 = vadd.f32 %v605, %v616
          %v634 = vadd.f32 %v606, %v620
          %v635 = vadd.f32 %v607, %v616
          %v636 = vadd.f32 %v608, %v620
          %v637 = vadd.f32 %v609, %v616
          %v638 = vadd.f32 %v610, %v620
          %639 = vst [vmem:[%s323] sm:$0xff] %v623
          %640 = vst [vmem:[%s323 + $0x8] sm:$0xff] %v624
          %641 = vst [vmem:[%s323 + $0x10] sm:$0xff] %v625
          %642 = vst [vmem:[%s323 + $0x18] sm:$0xff] %v626
          %643 = vst [vmem:[%s323 + $0x20] sm:$0xff] %v627
          %644 = vst [vmem:[%s323 + $0x28] sm:$0xff] %v628
          %645 = vst [vmem:[%s323 + $0x30] sm:$0xff] %v629
          %646 = vst [vmem:[%s323 + $0x38] sm:$0xff] %v630
          %647 = vst [vmem:[%s323 + $0x40] sm:$0xff] %v631
          %648 = vst [vmem:[%s323 + $0x48] sm:$0xff] %v632
          %649 = vst [vmem:[%s323 + $0x50] sm:$0xff] %v633
          %650 = vst [vmem:[%s323 + $0x58] sm:$0xff] %v634
          %651 = vst [vmem:[%s323 + $0x60] sm:$0xff] %v635
          %652 = vst [vmem:[%s323 + $0x68] sm:$0xff] %v636
          %653 = vst [vmem:[%s323 + $0x70] sm:$0xff] %v637
          %654 = vst [vmem:[%s323 + $0x78] sm:$0xff] %v638
        $region78: #{lstm_class_forward.5} parent=65 // pred_fallthru
          _
        %s655 = sand.u32 %s125, 1
        %s656 = sand.u32 %s125, 1
        %s657 = smul.addr %s656, 128
        %s658 = scalar_lea.vmem [#allocation4], %s657
        // Predicated region
        $region79: #{lstm_class_forward.5} parent=65 // pred_check
          %p659 = pneg %p135
        $region80: #{lstm_class_forward.5} parent=65 // pred_check_branch
          %661 = sbr.rel (%p659) target = $region82
        $region81: #{lstm_class_forward.5} parent=65 // pred_region
          %s662 = smul.u32 8, %s19
          %s663 = smul.u32 2, %s20
          %s664 = smul.addr %s662, 4
          %s665 = sadd.s32 %s663, %s664
          %s666 = smul.addr %s665, 8
          %s667 = scalar_lea.vmem %s3, %s666
          // Predicated region
          $region83: #{lstm_class_forward.5} parent=81 // pred_check
            _
          $region84: #{lstm_class_forward.5} parent=81 // pred_check_branch
            %669 = sbr.rel (0) target = $region86
          $region85: #{lstm_class_forward.5} parent=81 // pred_region
            // Predicated region
            $region87: #{lstm_class_forward.5} parent=85 // pred_check
              _
            $region88: #{lstm_class_forward.5} parent=85 // pred_check_branch
              %671 = sbr.rel (0) target = $region90
            $region89: #{lstm_class_forward.5} parent=85 // pred_region
              loop: start=0, step=1, limit=1
              $region91: #{lstm_class_forward.5} parent=89 // loop_pre_header
                _
              $region92: #{lstm_class_forward.5} parent=89 // loop_header
                %s673 = sphi 0, %s677
                %p674 = scmp.ge.s32.totalorder %s673, 1
                %s678 = sphi %s658, %s658
                %s679 = sphi %s667, %s667
              $region93: #{lstm_class_forward.5} parent=89 // loop_header_branch
                %676 = sbr.rel (%p674) target = $region97
              $region94: #{lstm_class_forward.5} parent=89 // loop_body
                %v680 = vld [vmem:[%s678] sm:$0xff]
                %681 = vst [vmem:[%s679] sm:$0xff] %v680
                %v682 = vld [vmem:[%s678 + $0x8] sm:$0xff]
                %683 = vst [vmem:[%s679 + $0x8] sm:$0xff] %v682
                %v684 = vld [vmem:[%s678 + $0x10] sm:$0xff]
                %685 = vst [vmem:[%s679 + $0x20] sm:$0xff] %v684
                %v686 = vld [vmem:[%s678 + $0x18] sm:$0xff]
                %687 = vst [vmem:[%s679 + $0x28] sm:$0xff] %v686
                %v688 = vld [vmem:[%s678 + $0x20] sm:$0xff]
                %689 = vst [vmem:[%s679 + $0x40] sm:$0xff] %v688
                %v690 = vld [vmem:[%s678 + $0x28] sm:$0xff]
                %691 = vst [vmem:[%s679 + $0x48] sm:$0xff] %v690
                %v692 = vld [vmem:[%s678 + $0x30] sm:$0xff]
                %693 = vst [vmem:[%s679 + $0x60] sm:$0xff] %v692
                %v694 = vld [vmem:[%s678 + $0x38] sm:$0xff]
                %695 = vst [vmem:[%s679 + $0x68] sm:$0xff] %v694
                %v696 = vld [vmem:[%s678 + $0x40] sm:$0xff]
                %697 = vst [vmem:[%s679 + $0x80] sm:$0xff] %v696
                %v698 = vld [vmem:[%s678 + $0x48] sm:$0xff]
                %699 = vst [vmem:[%s679 + $0x88] sm:$0xff] %v698
                %v700 = vld [vmem:[%s678 + $0x50] sm:$0xff]
                %701 = vst [vmem:[%s679 + $0xa0] sm:$0xff] %v700
                %v702 = vld [vmem:[%s678 + $0x58] sm:$0xff]
                %703 = vst [vmem:[%s679 + $0xa8] sm:$0xff] %v702
                %v704 = vld [vmem:[%s678 + $0x60] sm:$0xff]
                %705 = vst [vmem:[%s679 + $0xc0] sm:$0xff] %v704
                %v706 = vld [vmem:[%s678 + $0x68] sm:$0xff]
                %707 = vst [vmem:[%s679 + $0xc8] sm:$0xff] %v706
                %v708 = vld [vmem:[%s678 + $0x70] sm:$0xff]
                %709 = vst [vmem:[%s679 + $0xe0] sm:$0xff] %v708
                %v710 = vld [vmem:[%s678 + $0x78] sm:$0xff]
                %711 = vst [vmem:[%s679 + $0xe8] sm:$0xff] %v710
              $region95: #{lstm_class_forward.5} parent=89 // loop_footer
                %s677 = sadd.s32 1, %s673
              $region96: #{lstm_class_forward.5} parent=89 // loop_footer_branch
                %672 = sbr.rel target = $region92
              $region97: #{lstm_class_forward.5} parent=89 // loop_exit
                _
            $region90: #{lstm_class_forward.5} parent=85 // pred_fallthru
              _
            // Predicated region
            $region98: #{lstm_class_forward.5} parent=85 // pred_check
              _
            $region99: #{lstm_class_forward.5} parent=85 // pred_check_branch
              %713 = sbr.rel target = $region101
            $region100: #{lstm_class_forward.5} parent=85 // pred_region
              _
            $region101: #{lstm_class_forward.5} parent=85 // pred_fallthru
              _
          $region86: #{lstm_class_forward.5} parent=81 // pred_fallthru
            _
          %714 = vnop
        $region82: #{lstm_class_forward.5} parent=65 // pred_fallthru
          _
      $region66: #{lstm_class_forward.5} parent=5 // pred_fallthru
        _
      %p715 = scmp.le.s32.totalorder 2, %s9
      // Predicated region
      $region102: #{lstm_class_forward.5} parent=5 // pred_check
        %p716 = pneg %p715
      $region103: #{lstm_class_forward.5} parent=5 // pred_check_branch
        %718 = sbr.rel (%p716) target = $region105
      $region104: #{lstm_class_forward.5} parent=5 // pred_region
        %s719 = ssub.s32 %s9, 2
        // Predicated region
        $region106: #{lstm_class_forward.5} parent=104 // pred_check
          %p720 = pneg %p141
        $region107: #{lstm_class_forward.5} parent=104 // pred_check_branch
          %722 = sbr.rel (%p720) target = $region109
        $region108: #{lstm_class_forward.5} parent=104 // pred_region
          %s723 = sand.u32 %s126, 1
          %s724 = sand.u32 %s126, 1
          %s725 = smul.addr %s724, 128
          %s726 = scalar_lea.vmem [#allocation4], %s725
        $region109: #{lstm_class_forward.5} parent=104 // pred_fallthru
          _
      $region105: #{lstm_class_forward.5} parent=5 // pred_fallthru
        _
    $region6: #{lstm_class_forward.5} parent=1 // loop_footer
      %s13 = sadd.s32 1, %s9
    $region7: #{lstm_class_forward.5} parent=1 // loop_footer_branch
      %8 = sbr.rel target = $region3
    $region8: #{lstm_class_forward.5} parent=1 // loop_exit
      _

// kernel: lstm_class_forward.9
$region0: #{lstm_class_forward.9}
  #allocation0 [shape = 'u32[]', space=smem, size = 0x4, offset = 0x4, fixed_abs, tag = 'smem constant byte address 0x4 - core index']
  #allocation1 [shape = 'u32[144,128]{1,0:T(1,128)}', space=vmem, size = 0x12000, scoped, tag = 'internal scratch']
  #allocation2 [shape = 'f32[32,128]{1,0:T(8,128)}', space=vmem, size = 0x4000, scoped, tag = 'scratch operand']
  %s0 = inlined_call_operand.vmem [shape: f32[32,128], index: 0, kind: input, shape index: {}]
  %s1 = inlined_call_operand.vmem [shape: bf16[128,128], index: 1, kind: input, shape index: {}]
  %s2 = inlined_call_operand.vmem [shape: f32[1,128], index: 2, kind: input, shape index: {}]
  %s3 = inlined_call_operand.hbm [shape: f32[32,128], index: 3, kind: output, shape index: {}]
  %s4 = sld [smem:[#allocation0]]
  $region30: #{lstm_class_forward.9} parent=0
    _
  %s6 = ssub.s32 1, %s4
  %s7 = scalar_select 0, %s6, %s4
  $region1: #{lstm_class_forward.9} parent=0
    #allocation3 [shape = 'u8[16384]{0}', space=vmem, size = 0x4000, scoped, tag = 'output window, operand 0, single buffered']
    #allocation4 [shape = 's32[1]{0}', space=sflag, size = 0x4, scoped, tag = 'scoped memory for lstm_class_forward.9']
    %8 = vsyncpa [#allocation4], 0
    // Predicated region
    $region2: #{lstm_class_forward.9} parent=1 // pred_check
      _
    $region3: #{lstm_class_forward.9} parent=1 // pred_check_branch
      %10 = sbr.rel (0) target = $region5
    $region4: #{lstm_class_forward.9} parent=1 // pred_region
      _
    $region5: #{lstm_class_forward.9} parent=1 // pred_fallthru
      _
    // Predicated region
    $region6: #{lstm_class_forward.9} parent=1 // pred_check
      _
    $region7: #{lstm_class_forward.9} parent=1 // pred_check_branch
      %12 = sbr.rel (0) target = $region9
    $region8: #{lstm_class_forward.9} parent=1 // pred_region
      _
    $region9: #{lstm_class_forward.9} parent=1 // pred_fallthru
      _
    // Predicated region
    $region10: #{lstm_class_forward.9} parent=1 // pred_check
      _
    $region11: #{lstm_class_forward.9} parent=1 // pred_check_branch
      %14 = sbr.rel (0) target = $region13
    $region12: #{lstm_class_forward.9} parent=1 // pred_region
      _
    $region13: #{lstm_class_forward.9} parent=1 // pred_fallthru
      _
    %p16 = scmp.eq.s32.totalorder 0, 0
    // Predicated region
    $region14: #{lstm_class_forward.9} parent=1 // pred_check
      %p17 = pneg %p16
    $region15: #{lstm_class_forward.9} parent=1 // pred_check_branch
      %19 = sbr.rel (%p17) target = $region17
    $region16: #{lstm_class_forward.9} parent=1 // pred_region
      %20 = vst [vmem:[#allocation2] sm:$0xff] 0.0
      %21 = vst [vmem:[#allocation2 + $0x8] sm:$0xff] 0.0
      %22 = vst [vmem:[#allocation2 + $0x10] sm:$0xff] 0.0
      %23 = vst [vmem:[#allocation2 + $0x18] sm:$0xff] 0.0
    $region17: #{lstm_class_forward.9} parent=1 // pred_fallthru
      _
    %v24 = vld [vmem:[#allocation2] sm:$0xff]
    %v25 = vld [vmem:[#allocation2 + $0x8] sm:$0xff]
    %v26 = vld [vmem:[#allocation2 + $0x10] sm:$0xff]
    %v27 = vld [vmem:[#allocation2 + $0x18] sm:$0xff]
    %v28 = vld [vmem:[%s0] sm:$0xff]
    %v29 = vld [vmem:[%s0 + $0x8] sm:$0xff]
    %v30 = vld [vmem:[%s0 + $0x10] sm:$0xff]
    %v31 = vld [vmem:[%s0 + $0x18] sm:$0xff]
    %v32 = vpack.c.bf16 %v29, %v28
    %v33 = vpack.c.bf16 %v31, %v30
    %v34 = vld [vmem:[%s1] sm:$0xf]
    %v35 = vld [vmem:[%s1 + $0x4] sm:$0xf]
    %v36 = vld [vmem:[%s1 + $0x8] sm:$0xf]
    %v37 = vld [vmem:[%s1 + $0xc] sm:$0xf]
    %v38 = vld [vmem:[%s1 + $0x10] sm:$0xf]
    %v39 = vld [vmem:[%s1 + $0x14] sm:$0xf]
    %v40 = vld [vmem:[%s1 + $0x18] sm:$0xf]
    %v41 = vld [vmem:[%s1 + $0x1c] sm:$0xf]
    %v42 = vld [vmem:[%s1 + $0x20] sm:$0xf]
    %v43 = vld [vmem:[%s1 + $0x24] sm:$0xf]
    %v44 = vld [vmem:[%s1 + $0x28] sm:$0xf]
    %v45 = vld [vmem:[%s1 + $0x2c] sm:$0xf]
    %v46 = vld [vmem:[%s1 + $0x30] sm:$0xf]
    %v47 = vld [vmem:[%s1 + $0x34] sm:$0xf]
    %v48 = vld [vmem:[%s1 + $0x38] sm:$0xf]
    %v49 = vld [vmem:[%s1 + $0x3c] sm:$0xf]
    %v66 = vunpack.c.l.b16 %v34
    %v67 = vunpack.c.l.b16 %v35
    %v68 = vunpack.c.l.b16 %v36
    %v69 = vunpack.c.l.b16 %v37
    %v70 = vunpack.c.l.b16 %v38
    %v71 = vunpack.c.l.b16 %v39
    %v72 = vunpack.c.l.b16 %v40
    %v73 = vunpack.c.l.b16 %v41
    %v74 = vunpack.c.l.b16 %v42
    %v75 = vunpack.c.l.b16 %v43
    %v76 = vunpack.c.l.b16 %v44
    %v77 = vunpack.c.l.b16 %v45
    %v78 = vunpack.c.l.b16 %v46
    %v79 = vunpack.c.l.b16 %v47
    %v80 = vunpack.c.l.b16 %v48
    %v81 = vunpack.c.l.b16 %v49
    %v82 = vpack.c.b16 %v67, %v66
    %v83 = vpack.c.b16 %v69, %v68
    %v84 = vpack.c.b16 %v71, %v70
    %v85 = vpack.c.b16 %v73, %v72
    %v86 = vpack.c.b16 %v75, %v74
    %v87 = vpack.c.b16 %v77, %v76
    %v88 = vpack.c.b16 %v79, %v78
    %v89 = vpack.c.b16 %v81, %v80
    %98 = vmatprep.subr.bf16.mxu0 0
    %99 = vmatpush1.bf16.msra.mxu0 %v82
    %100 = vmatprep.subr.bf16.mxu0 0
    %101 = vmatpush1.bf16.msra.mxu0 %v83
    %102 = vmatprep.subr.bf16.mxu0 0
    %103 = vmatpush1.bf16.msra.mxu0 %v84
    %104 = vmatprep.subr.bf16.mxu0 0
    %105 = vmatpush1.bf16.msra.mxu0 %v85
    %106 = vmatprep.subr.bf16.mxu0 0
    %107 = vmatpush1.bf16.msra.mxu0 %v86
    %108 = vmatprep.subr.bf16.mxu0 0
    %109 = vmatpush1.bf16.msra.mxu0 %v87
    %110 = vmatprep.subr.bf16.mxu0 0
    %111 = vmatpush1.bf16.msra.mxu0 %v88
    %112 = vmatprep.subr.bf16.mxu0 0
    %113 = vmatpush1.bf16.msra.mxu0 %v89
    %114 = vmatprep.subr.bf16.mxu0 0
    %115 = vmatpush1.bf16.msra.mxu0 0
    %116 = vmatprep.subr.bf16.mxu0 0
    %117 = vmatpush1.bf16.msra.mxu0 0
    %118 = vmatprep.subr.bf16.mxu0 0
    %119 = vmatpush1.bf16.msra.mxu0 0
    %120 = vmatprep.subr.bf16.mxu0 0
    %121 = vmatpush1.bf16.msra.mxu0 0
    %122 = vmatprep.subr.bf16.mxu0 0
    %123 = vmatpush1.bf16.msra.mxu0 0
    %124 = vmatprep.subr.bf16.mxu0 0
    %125 = vmatpush1.bf16.msra.mxu0 0
    %126 = vmatprep.subr.bf16.mxu0 0
    %127 = vmatpush1.bf16.msra.mxu0 0
    %128 = vmatprep.subr.bf16.mxu0 0
    %129 = vmatpush1.bf16.msra.mxu0 0
    %130 = vmatprep.mubr.bf16.mxu0 0
    %131 = vmatmul.mubr.bf16.gmra.mrb[0].mxu0 %v32
    %v132 = vpop.f32.mrb[0].mxu0
    %v133 = vadd.f32 0.0, %v132
    %v134 = vpop.f32.mrb[0].mxu0
    %v135 = vpop.f32.mrb[0].mxu0
    %v136 = vadd.f32 0.0, %v135
    %v137 = vpop.f32.mrb[0].mxu0
    %138 = vmatprep.mubr.bf16.mxu0 0
    %139 = vmatmul.mubr.bf16.gmra.mrb[0].mxu0 %v33
    %v140 = vpop.f32.mrb[0].mxu0
    %v141 = vadd.f32 0.0, %v140
    %v142 = vpop.f32.mrb[0].mxu0
    %v143 = vpop.f32.mrb[0].mxu0
    %v144 = vadd.f32 0.0, %v143
    %v145 = vpop.f32.mrb[0].mxu0
    %146 = vdwg.mxu0
    %v147 = vadd.f32 %v24, %v133
    %v148 = vadd.f32 %v25, %v136
    %v149 = vadd.f32 %v26, %v141
    %v150 = vadd.f32 %v27, %v144
    %151 = vst [vmem:[#allocation2] sm:$0xff] %v147
    %152 = vst [vmem:[#allocation2 + $0x8] sm:$0xff] %v148
    %153 = vst [vmem:[#allocation2 + $0x10] sm:$0xff] %v149
    %154 = vst [vmem:[#allocation2 + $0x18] sm:$0xff] %v150
    // Predicated region
    $region18: #{lstm_class_forward.9} parent=1 // pred_check
      %p155 = pneg %p16
    $region19: #{lstm_class_forward.9} parent=1 // pred_check_branch
      %157 = sbr.rel (%p155) target = $region21
    $region20: #{lstm_class_forward.9} parent=1 // pred_region
      %v158 = vld [vmem:[#allocation2] sm:$0xff]
      %v159 = vld [vmem:[#allocation2 + $0x8] sm:$0xff]
      %v160 = vld [vmem:[#allocation2 + $0x10] sm:$0xff]
      %v161 = vld [vmem:[#allocation2 + $0x18] sm:$0xff]
      %v162 = vld [vmem:[%s2] sm:$0x1]
      %v164 = vlaneseq
      %v165 = vshrl.u32 %v164, 7
      %v166 = vsub.s32 0, %v165
      %v167 = vrot.slane %v162, %v166
      %v169 = vadd.f32 %v158, %v167
      %v170 = vadd.f32 %v159, %v167
      %v171 = vadd.f32 %v160, %v167
      %v172 = vadd.f32 %v161, %v167
      %173 = vst [vmem:[#allocation3] sm:$0xff] %v169
      %174 = vst [vmem:[#allocation3 + $0x8] sm:$0xff] %v170
      %175 = vst [vmem:[#allocation3 + $0x10] sm:$0xff] %v171
      %176 = vst [vmem:[#allocation3 + $0x18] sm:$0xff] %v172
    $region21: #{lstm_class_forward.9} parent=1 // pred_fallthru
      _
    // Predicated region
    $region22: #{lstm_class_forward.9} parent=1 // pred_check
      _
    $region23: #{lstm_class_forward.9} parent=1 // pred_check_branch
      %178 = sbr.rel (0) target = $region25
    $region24: #{lstm_class_forward.9} parent=1 // pred_region
      %s180 = ssub.s32 512, 512
      %181 = vsyncadd [#allocation4], %s180
      %s182 = sshll.u32 [#allocation3], 4
      %s183 = int_to_ptr.vmem [resolvable:$true] %s182
      %188 = dma.vmem_to_hbm [thread:$0]  %s183, 512, %s3, [#allocation4], 128, 128, 8
    $region25: #{lstm_class_forward.9} parent=1 // pred_fallthru
      _
    // Predicated region
    $region26: #{lstm_class_forward.9} parent=1 // pred_check
      _
    $region27: #{lstm_class_forward.9} parent=1 // pred_check_branch
      %190 = sbr.rel (0) target = $region29
    $region28: #{lstm_class_forward.9} parent=1 // pred_region
      %191 = dma.done [#allocation4], 512
    $region29: #{lstm_class_forward.9} parent=1 // pred_fallthru
      _
    %192 = vsyncpa [#allocation4], 1

</llo_original>
